<compile_context>
chip_gen: v7x
topology: tpu7x:2x2x1
jax: 0.10.0
libtpu: 0.0.40
codegen_flags: <defaults>
</compile_context>

<pallas_src>
import math
import jax
import jax.numpy as jnp
from jax.experimental import pallas as pl
from jax.experimental.pallas import tpu as pltpu

# Toy sizes consistent with the module: batch=2, seq=8, hidden=32, heads=4, ff=64.
B, S, D, H, FF = 2, 8, 32, 4, 64
HD = D // H
NUM_LAYERS = 2
EPS = 1e-5                      # nn.LayerNorm default eps

# Packed parameter layout (per layer):
#   weights (D, 3D+D+FF+FF) = (32, 256):
#     [:,   0: 96] Wq|Wk|Wv fused   [:, 96:128] Wo
#     [:, 128:192] W1 (fc1)         [:,192:256] W2^T (fc2, torch layout)
#   vectors (8, 3D) = (8, 96), one row each (zero padded):
#     0: bq|bk|bv   1: bo   2: ln1 gamma   3: ln1 beta
#     4: b1 (fc1)   5: b2   6: ln2 gamma   7: ln2 beta
WCOLS = 3 * D + D + FF + FF      # 256
VROWS, VCOLS = 8, 3 * D          # 8, 96
G = H * B                        # flattened (head, batch) attention groups
R = B * S                        # flattened token rows


def _layer_norm(v, gamma, beta):
    mean = jnp.mean(v, axis=-1, keepdims=True)
    cent = v - mean
    var = jnp.mean(cent * cent, axis=-1, keepdims=True)
    return cent * jax.lax.rsqrt(var + EPS) * gamma + beta


def _gelu_exact(v):
    # F.gelu default (erf-based, exact)
    return 0.5 * v * (1.0 + jax.lax.erf(v * (1.0 / math.sqrt(2.0))))


def decoder_kernel(x_ref, neg_ref, w_ref, vec_ref, out_ref):
    l = pl.program_id(0)

    # Layer 0: seed the resident residual stream with the input.
    @pl.when(l == 0)
    def _():
        out_ref[...] = x_ref[...]

    x = out_ref[...].reshape(R, D)   # (16, 32) residual stream (prev layer output)
    neg = neg_ref[...]               # (G, S, S) additive mask (0 = attend, -1e9 = masked)
    w = w_ref[0]                     # (32, 256) packed weights for this layer
    vec = vec_ref[0]                 # (8, 96) packed bias / LN vectors

    wqkv = w[:, 0:3 * D]                       # (D, 3D)
    wo = w[:, 3 * D:4 * D]                     # (D, D)
    w1 = w[:, 4 * D:4 * D + FF]                # (D, FF)
    w2t = w[:, 4 * D + FF:4 * D + 2 * FF]      # (D, FF)  == fc2 weight (torch layout)

    bqkv = vec[0:1, 0:3 * D]
    bo = vec[1:2, 0:D]
    g1 = vec[2:3, 0:D]
    be1 = vec[3:4, 0:D]
    b1 = vec[4:5, 0:FF]
    b2 = vec[5:6, 0:D]
    g2 = vec[6:7, 0:D]
    be2 = vec[7:8, 0:D]

    # ---- fused QKV projection (one MXU matmul over all B*S rows) ----
    qkv = jnp.dot(x, wqkv, preferred_element_type=jnp.float32) + bqkv   # (R, 3D)

    # ---- batched multi-head attention over G = H*B groups (no scratch) ----
    def heads(off):
        # group index g = h*B + b
        return jnp.concatenate(
            [qkv[:, off + h * HD: off + (h + 1) * HD].reshape(B, S, HD)
             for h in range(H)], axis=0)                                # (G, S, HD)

    q3 = heads(0)
    k3 = heads(D)
    v3 = heads(2 * D)

    scale = 1.0 / math.sqrt(HD)
    s = jnp.einsum('gqd,gkd->gqk', q3, k3,
                   preferred_element_type=jnp.float32) * scale          # (G, S, S)
    s = s + neg                                                          # additive mask
    s = s - jnp.max(s, axis=-1, keepdims=True)
    p = jnp.exp(s)
    p = p * pl.reciprocal(jnp.sum(p, axis=-1, keepdims=True), approx=True)
    ctx = jnp.einsum('gqk,gkd->gqd', p, v3,
                     preferred_element_type=jnp.float32)                 # (G, S, HD)
    # regroup heads back to (R, D): head h of batch b sits at ctx[h*B + b]
    ctx2d = jnp.concatenate([ctx[h * B:(h + 1) * B] for h in range(H)],
                            axis=-1).reshape(R, D)

    attn_out = jnp.dot(ctx2d, wo, preferred_element_type=jnp.float32) + bo
    h1 = _layer_norm(x + attn_out, g1, be1)

    # ---- MLP: fc1 -> GELU -> fc2, residual + LayerNorm ----
    ff = jnp.dot(h1, w1, preferred_element_type=jnp.float32) + b1
    ff = _gelu_exact(ff)
    # fc2: contract ff's FF axis with the torch-layout (D, FF) weight (trans_b matmul).
    ff = jax.lax.dot_general(ff, w2t, (((1,), (1,)), ((), ())),
                             preferred_element_type=jnp.float32) + b2
    out_ref[...] = _layer_norm(h1 + ff, g2, be2).reshape(B, S, D)


def decoder_forward(x, mask, wstack, vstack):
    num_layers = wstack.shape[0]
    # Additive mask computed once in the wrapper, pre-broadcast to all heads
    # (group ordering g = h*B + b matches the kernel's head packing).
    neg = jnp.where(mask == 0, -1e9, 0.0).astype(jnp.float32)           # (B, S, S)
    neg_g = jnp.broadcast_to(neg[None], (H, B, S, S)).reshape(G, S, S)  # (G, S, S)
    return pl.pallas_call(
        decoder_kernel,
        out_shape=jax.ShapeDtypeStruct((B, S, D), jnp.float32),
        grid_spec=pltpu.PrefetchScalarGridSpec(
            num_scalar_prefetch=0,
            grid=(num_layers,),
            in_specs=[
                pl.BlockSpec((B, S, D), lambda l: (0, 0, 0)),           # x
                pl.BlockSpec((G, S, S), lambda l: (0, 0, 0)),           # additive mask
                pl.BlockSpec((1, D, WCOLS), lambda l: (l, 0, 0)),       # packed weights
                pl.BlockSpec((1, VROWS, VCOLS), lambda l: (l, 0, 0)),   # packed vectors
            ],
            out_specs=pl.BlockSpec((B, S, D), lambda l: (0, 0, 0)),     # resident stream
        ),
        compiler_params=pltpu.CompilerParams(
            dimension_semantics=("arbitrary",)),
    )(x, neg_g, wstack, vstack)


# ----------------------------- parameters & reference -----------------------------

def init_layer_params(key, num_layers):
    f32 = jnp.float32
    layers = []
    for lk in jax.random.split(key, num_layers):
        ks = jax.random.split(lk, 10)

        def lin(k, din, dout):
            w = 0.05 * jax.random.normal(k, (din, dout), f32)   # stored (in, out)
            b = jnp.full((dout,), 0.01, f32)
            return w, b

        wq, bq = lin(ks[0], D, D)
        wk, bk = lin(ks[1], D, D)
        wv, bv = lin(ks[2], D, D)
        wo, bo = lin(ks[3], D, D)
        w1, b1 = lin(ks[4], D, FF)
        w2, b2 = lin(ks[5], FF, D)
        g1 = 1.0 + 0.1 * jax.random.normal(ks[6], (D,), f32)
        be1 = 0.05 * jax.random.normal(ks[7], (D,), f32)
        g2 = 1.0 + 0.1 * jax.random.normal(ks[8], (D,), f32)
        be2 = 0.05 * jax.random.normal(ks[9], (D,), f32)
        layers.append((wq, bq, wk, bk, wv, bv, wo, bo,
                       g1, be1, w1, b1, w2, b2, g2, be2))
    return layers


def pack_params(layer_params):
    wbufs, vbufs = [], []
    for (wq, bq, wk, bk, wv, bv, wo, bo, g1, be1, w1, b1, w2, b2, g2, be2) in layer_params:
        wbuf = jnp.concatenate([wq, wk, wv, wo, w1, w2.T], axis=1)      # (D, 256)

        def row(v):
            return jnp.pad(v, (0, VCOLS - v.shape[0]))[None, :]

        vbuf = jnp.concatenate([
            row(jnp.concatenate([bq, bk, bv])),
            row(bo), row(g1), row(be1),
            row(b1), row(b2), row(g2), row(be2)], axis=0)               # (8, 96)
        wbufs.append(wbuf)
        vbufs.append(vbuf)
    return jnp.stack(wbufs), jnp.stack(vbufs)


def reference(x, mask, layer_params):
    """Pure-JAX reference mirroring the PyTorch forward (dropout = identity)."""
    for (wq, bq, wk, bk, wv, bv, wo, bo, g1, be1, w1, b1, w2, b2, g2, be2) in layer_params:
        q = (x @ wq + bq).reshape(B, S, H, HD).transpose(0, 2, 1, 3)
        k = (x @ wk + bk).reshape(B, S, H, HD).transpose(0, 2, 1, 3)
        v = (x @ wv + bv).reshape(B, S, H, HD).transpose(0, 2, 1, 3)
        scores = jnp.einsum('bhqd,bhkd->bhqk', q, k) / math.sqrt(HD)
        scores = jnp.where(mask[:, None, :, :] == 0, -1e9, scores)
        attn = jax.nn.softmax(scores, axis=-1)
        o = jnp.einsum('bhqk,bhkd->bhqd', attn, v).transpose(0, 2, 1, 3).reshape(B, S, D)
        attn_out = o @ wo + bo
        h1 = _layer_norm(x + attn_out, g1, be1)
        ff = jax.nn.gelu(h1 @ w1 + b1, approximate=False) @ w2 + b2
        x = _layer_norm(h1 + ff, g2, be2)
    return x


if __name__ == "__main__":
    key = jax.random.PRNGKey(0)
    kx, kp = jax.random.split(key)
    x = jax.random.normal(kx, (B, S, D), jnp.float32)

    # Padding-style mask: batch 0 attends to all 8 positions, batch 1 to first 5.
    lengths = jnp.array([S, 5], jnp.int32)
    col = jnp.arange(S)[None, None, :]
    mask = (col < lengths[:, None, None]).astype(jnp.float32)    # (B,1,S)
    mask = jnp.broadcast_to(mask, (B, S, S))                     # (B,S,S)

    layer_params = init_layer_params(kp, NUM_LAYERS)
    wstack, vstack = pack_params(layer_params)

    out = decoder_forward(x, mask, wstack, vstack)
    out = jax.block_until_ready(out)

    ref = reference(x, mask, layer_params)
    err = float(jnp.max(jnp.abs(out - ref)))
    assert out.shape == (B, S, D)
    # 5e-3 tolerance absorbs the approximate (EUP) softmax reciprocal over 2 layers.
    assert jnp.allclose(out, ref, atol=5e-3, rtol=5e-3), f"max abs err = {err}"
    print("KERNEL_OK")
</pallas_src>

<mosaic_0001>
module attributes {stable_mosaic.version = 11 : i64} {
  func.func @decoder_kernel(%arg0: i32, %arg1: memref<2x8x32xf32, #tpu.memory_space<vmem>>, %arg2: memref<8x8x8xf32, #tpu.memory_space<vmem>>, %arg3: memref<1x32x256xf32, #tpu.memory_space<vmem>>, %arg4: memref<1x8x96xf32, #tpu.memory_space<vmem>>, %arg5: memref<2x8x32xf32, #tpu.memory_space<vmem>>) attributes {dimension_semantics = [#tpu.dimension_semantics<arbitrary>], iteration_bounds = array<i64: 2>, scalar_prefetch = 0 : i64, scratch_operands = 0 : i64, tpu.core_type = #tpu.core_type<tc>, window_params = [{pipeline_mode = #tpu.pipeline_mode<synchronous>, transform_indices = @transform_0, window_bounds = array<i64: 2, 8, 32>}, {pipeline_mode = #tpu.pipeline_mode<synchronous>, transform_indices = @transform_1, window_bounds = array<i64: 8, 8, 8>}, {transform_indices = @transform_2, window_bounds = array<i64: 1, 32, 256>}, {transform_indices = @transform_3, window_bounds = array<i64: 1, 8, 96>}, {pipeline_mode = #tpu.pipeline_mode<synchronous>, transform_indices = @transform_4, window_bounds = array<i64: 2, 8, 32>}]} {
    %c0_i32 = arith.constant 0 : i32
    %0 = arith.cmpi eq, %arg0, %c0_i32 : i32
    %1 = arith.extui %0 : i1 to i32
    %c0_i32_0 = arith.constant 0 : i32
    %2 = arith.cmpi ne, %1, %c0_i32_0 : i32
    scf.if %2 {
      %c0_36 = arith.constant 0 : index
      %c0_37 = arith.constant 0 : index
      %c0_38 = arith.constant 0 : index
      %134 = vector.load %arg1[%c0_36, %c0_37, %c0_38] : memref<2x8x32xf32, #tpu.memory_space<vmem>>, vector<2x8x32xf32>
      %c0_39 = arith.constant 0 : index
      %c0_40 = arith.constant 0 : index
      %c0_41 = arith.constant 0 : index
      %135 = vector.load %arg5[%c0_39, %c0_40, %c0_41] : memref<2x8x32xf32, #tpu.memory_space<vmem>>, vector<2x8x32xf32>
      tpu.vector_store %arg5[%c0_39, %c0_40, %c0_41], %134 {strides = array<i32>} : memref<2x8x32xf32, #tpu.memory_space<vmem>>, vector<2x8x32xf32>,
    } else {
    }
    %c0 = arith.constant 0 : index
    %c0_1 = arith.constant 0 : index
    %c0_2 = arith.constant 0 : index
    %3 = vector.load %arg5[%c0, %c0_1, %c0_2] : memref<2x8x32xf32, #tpu.memory_space<vmem>>, vector<2x8x32xf32>
    %4 = vector.shape_cast %3 : vector<2x8x32xf32> to vector<16x32xf32>
    %c0_3 = arith.constant 0 : index
    %c0_4 = arith.constant 0 : index
    %c0_5 = arith.constant 0 : index
    %5 = vector.load %arg2[%c0_3, %c0_4, %c0_5] : memref<8x8x8xf32, #tpu.memory_space<vmem>>, vector<8x8x8xf32>
    %c0_6 = arith.constant 0 : index
    %c0_7 = arith.constant 0 : index
    %c0_8 = arith.constant 0 : index
    %6 = vector.load %arg3[%c0_6, %c0_7, %c0_8] : memref<1x32x256xf32, #tpu.memory_space<vmem>>, vector<1x32x256xf32>
    %7 = vector.shape_cast %6 : vector<1x32x256xf32> to vector<32x256xf32>
    %c0_9 = arith.constant 0 : index
    %c0_10 = arith.constant 0 : index
    %c0_11 = arith.constant 0 : index
    %8 = vector.load %arg4[%c0_9, %c0_10, %c0_11] : memref<1x8x96xf32, #tpu.memory_space<vmem>>, vector<1x8x96xf32>
    %9 = vector.shape_cast %8 : vector<1x8x96xf32> to vector<8x96xf32>
    %10 = vector.extract_strided_slice %7 {offsets = [0, 0], sizes = [32, 96], strides = [1, 1]} : vector<32x256xf32> to vector<32x96xf32>
    %11 = vector.extract_strided_slice %7 {offsets = [0, 96], sizes = [32, 32], strides = [1, 1]} : vector<32x256xf32> to vector<32x32xf32>
    %12 = vector.extract_strided_slice %7 {offsets = [0, 128], sizes = [32, 64], strides = [1, 1]} : vector<32x256xf32> to vector<32x64xf32>
    %13 = vector.extract_strided_slice %7 {offsets = [0, 192], sizes = [32, 64], strides = [1, 1]} : vector<32x256xf32> to vector<32x64xf32>
    %14 = vector.extract_strided_slice %9 {offsets = [0, 0], sizes = [1, 96], strides = [1, 1]} : vector<8x96xf32> to vector<1x96xf32>
    %15 = vector.extract_strided_slice %9 {offsets = [1, 0], sizes = [1, 32], strides = [1, 1]} : vector<8x96xf32> to vector<1x32xf32>
    %16 = vector.extract_strided_slice %9 {offsets = [2, 0], sizes = [1, 32], strides = [1, 1]} : vector<8x96xf32> to vector<1x32xf32>
    %17 = vector.extract_strided_slice %9 {offsets = [3, 0], sizes = [1, 32], strides = [1, 1]} : vector<8x96xf32> to vector<1x32xf32>
    %18 = vector.extract_strided_slice %9 {offsets = [4, 0], sizes = [1, 64], strides = [1, 1]} : vector<8x96xf32> to vector<1x64xf32>
    %19 = vector.extract_strided_slice %9 {offsets = [5, 0], sizes = [1, 32], strides = [1, 1]} : vector<8x96xf32> to vector<1x32xf32>
    %20 = vector.extract_strided_slice %9 {offsets = [6, 0], sizes = [1, 32], strides = [1, 1]} : vector<8x96xf32> to vector<1x32xf32>
    %21 = vector.extract_strided_slice %9 {offsets = [7, 0], sizes = [1, 32], strides = [1, 1]} : vector<8x96xf32> to vector<1x32xf32>
    %cst = arith.constant dense<0.000000e+00> : vector<16x96xf32>
    %22 = tpu.matmul %4, %10, %cst {dimension_numbers = #tpu.dot_dimension_numbers<[1], [0], [0], [1], [0, 0, 1, 1], [], []>} : vector<16x32xf32>, vector<32x96xf32>, vector<16x96xf32> -> vector<16x96xf32>
    %23 = vector.broadcast %14 : vector<1x96xf32> to vector<16x96xf32>
    %24 = arith.addf %22, %23 : vector<16x96xf32>
    %25 = vector.extract_strided_slice %24 {offsets = [0, 0], sizes = [16, 8], strides = [1, 1]} : vector<16x96xf32> to vector<16x8xf32>
    %26 = vector.shape_cast %25 : vector<16x8xf32> to vector<2x8x8xf32>
    %27 = vector.extract_strided_slice %24 {offsets = [0, 8], sizes = [16, 8], strides = [1, 1]} : vector<16x96xf32> to vector<16x8xf32>
    %28 = vector.shape_cast %27 : vector<16x8xf32> to vector<2x8x8xf32>
    %29 = vector.extract_strided_slice %24 {offsets = [0, 16], sizes = [16, 8], strides = [1, 1]} : vector<16x96xf32> to vector<16x8xf32>
    %30 = vector.shape_cast %29 : vector<16x8xf32> to vector<2x8x8xf32>
    %31 = vector.extract_strided_slice %24 {offsets = [0, 24], sizes = [16, 8], strides = [1, 1]} : vector<16x96xf32> to vector<16x8xf32>
    %32 = vector.shape_cast %31 : vector<16x8xf32> to vector<2x8x8xf32>
    %33 = tpu.concatenate %26, %28, %30, %32 in 0 : vector<2x8x8xf32>, vector<2x8x8xf32>, vector<2x8x8xf32>, vector<2x8x8xf32> -> vector<8x8x8xf32>
    %34 = vector.extract_strided_slice %24 {offsets = [0, 32], sizes = [16, 8], strides = [1, 1]} : vector<16x96xf32> to vector<16x8xf32>
    %35 = vector.shape_cast %34 : vector<16x8xf32> to vector<2x8x8xf32>
    %36 = vector.extract_strided_slice %24 {offsets = [0, 40], sizes = [16, 8], strides = [1, 1]} : vector<16x96xf32> to vector<16x8xf32>
    %37 = vector.shape_cast %36 : vector<16x8xf32> to vector<2x8x8xf32>
    %38 = vector.extract_strided_slice %24 {offsets = [0, 48], sizes = [16, 8], strides = [1, 1]} : vector<16x96xf32> to vector<16x8xf32>
    %39 = vector.shape_cast %38 : vector<16x8xf32> to vector<2x8x8xf32>
    %40 = vector.extract_strided_slice %24 {offsets = [0, 56], sizes = [16, 8], strides = [1, 1]} : vector<16x96xf32> to vector<16x8xf32>
    %41 = vector.shape_cast %40 : vector<16x8xf32> to vector<2x8x8xf32>
    %42 = tpu.concatenate %35, %37, %39, %41 in 0 : vector<2x8x8xf32>, vector<2x8x8xf32>, vector<2x8x8xf32>, vector<2x8x8xf32> -> vector<8x8x8xf32>
    %43 = vector.extract_strided_slice %24 {offsets = [0, 64], sizes = [16, 8], strides = [1, 1]} : vector<16x96xf32> to vector<16x8xf32>
    %44 = vector.shape_cast %43 : vector<16x8xf32> to vector<2x8x8xf32>
    %45 = vector.extract_strided_slice %24 {offsets = [0, 72], sizes = [16, 8], strides = [1, 1]} : vector<16x96xf32> to vector<16x8xf32>
    %46 = vector.shape_cast %45 : vector<16x8xf32> to vector<2x8x8xf32>
    %47 = vector.extract_strided_slice %24 {offsets = [0, 80], sizes = [16, 8], strides = [1, 1]} : vector<16x96xf32> to vector<16x8xf32>
    %48 = vector.shape_cast %47 : vector<16x8xf32> to vector<2x8x8xf32>
    %49 = vector.extract_strided_slice %24 {offsets = [0, 88], sizes = [16, 8], strides = [1, 1]} : vector<16x96xf32> to vector<16x8xf32>
    %50 = vector.shape_cast %49 : vector<16x8xf32> to vector<2x8x8xf32>
    %51 = tpu.concatenate %44, %46, %48, %50 in 0 : vector<2x8x8xf32>, vector<2x8x8xf32>, vector<2x8x8xf32>, vector<2x8x8xf32> -> vector<8x8x8xf32>
    "tpu.trace_start"() <{level = 10 : i32, message = "gqd,gkd->gqk"}> : () -> ()
    %cst_12 = arith.constant dense<0.000000e+00> : vector<8x8x8xf32>
    %52 = tpu.matmul %33, %42, %cst_12 {dimension_numbers = #tpu.dot_dimension_numbers<[2], [2], [1], [1], [0, 0, 0, 1, 1, 1], [0], [0]>} : vector<8x8x8xf32>, vector<8x8x8xf32>, vector<8x8x8xf32> -> vector<8x8x8xf32>
    "tpu.trace_stop"() : () -> ()
    %cst_13 = arith.constant 0.353553385 : f32
    %53 = vector.broadcast %cst_13 : f32 to vector<8x8x8xf32>
    %54 = arith.mulf %52, %53 : vector<8x8x8xf32>
    %55 = arith.addf %54, %5 : vector<8x8x8xf32>
    %cst_14 = arith.constant dense<0xFF800000> : vector<8x8xf32>
    %56 = vector.multi_reduction <maximumf>, %55, %cst_14 [2] : vector<8x8x8xf32> to vector<8x8xf32>
    %57 = vector.shape_cast %56 : vector<8x8xf32> to vector<8x8x1xf32>
    %58 = vector.broadcast %57 : vector<8x8x1xf32> to vector<8x8x8xf32>
    %59 = arith.subf %55, %58 : vector<8x8x8xf32>
    %60 = math.exp %59 : vector<8x8x8xf32>
    %cst_15 = arith.constant dense<0.000000e+00> : vector<8x8xf32>
    %61 = vector.multi_reduction <add>, %60, %cst_15 [2] : vector<8x8x8xf32> to vector<8x8xf32>
    %62 = vector.shape_cast %61 : vector<8x8xf32> to vector<8x8x1xf32>
    %63 = tpu.reciprocal %62 {approx = true} : vector<8x8x1xf32> -> vector<8x8x1xf32>
    %64 = vector.broadcast %63 : vector<8x8x1xf32> to vector<8x8x8xf32>
    %65 = arith.mulf %60, %64 : vector<8x8x8xf32>
    "tpu.trace_start"() <{level = 10 : i32, message = "gqk,gkd->gqd"}> : () -> ()
    %cst_16 = arith.constant dense<0.000000e+00> : vector<8x8x8xf32>
    %66 = tpu.matmul %65, %51, %cst_16 {dimension_numbers = #tpu.dot_dimension_numbers<[2], [1], [1], [2], [0, 0, 0, 1, 1, 2], [0], [0]>} : vector<8x8x8xf32>, vector<8x8x8xf32>, vector<8x8x8xf32> -> vector<8x8x8xf32>
    "tpu.trace_stop"() : () -> ()
    %67 = vector.extract_strided_slice %66 {offsets = [0, 0, 0], sizes = [2, 8, 8], strides = [1, 1, 1]} : vector<8x8x8xf32> to vector<2x8x8xf32>
    %68 = vector.extract_strided_slice %66 {offsets = [2, 0, 0], sizes = [2, 8, 8], strides = [1, 1, 1]} : vector<8x8x8xf32> to vector<2x8x8xf32>
    %69 = vector.extract_strided_slice %66 {offsets = [4, 0, 0], sizes = [2, 8, 8], strides = [1, 1, 1]} : vector<8x8x8xf32> to vector<2x8x8xf32>
    %70 = vector.extract_strided_slice %66 {offsets = [6, 0, 0], sizes = [2, 8, 8], strides = [1, 1, 1]} : vector<8x8x8xf32> to vector<2x8x8xf32>
    %71 = tpu.concatenate %67, %68, %69, %70 in 2 : vector<2x8x8xf32>, vector<2x8x8xf32>, vector<2x8x8xf32>, vector<2x8x8xf32> -> vector<2x8x32xf32>
    %72 = vector.shape_cast %71 : vector<2x8x32xf32> to vector<16x32xf32>
    %cst_17 = arith.constant dense<0.000000e+00> : vector<16x32xf32>
    %73 = tpu.matmul %72, %11, %cst_17 {dimension_numbers = #tpu.dot_dimension_numbers<[1], [0], [0], [1], [0, 0, 1, 1], [], []>} : vector<16x32xf32>, vector<32x32xf32>, vector<16x32xf32> -> vector<16x32xf32>
    %74 = vector.broadcast %15 : vector<1x32xf32> to vector<16x32xf32>
    %75 = arith.addf %73, %74 : vector<16x32xf32>
    %76 = arith.addf %4, %75 : vector<16x32xf32>
    %cst_18 = arith.constant dense<0.000000e+00> : vector<16xf32>
    %77 = vector.multi_reduction <add>, %76, %cst_18 [1] : vector<16x32xf32> to vector<16xf32>
    %78 = vector.shape_cast %77 : vector<16xf32> to vector<16x1xf32>
    %cst_19 = arith.constant 3.200000e+01 : f32
    %79 = vector.broadcast %cst_19 : f32 to vector<16x1xf32>
    %80 = arith.divf %78, %79 : vector<16x1xf32>
    %81 = vector.broadcast %80 : vector<16x1xf32> to vector<16x32xf32>
    %82 = arith.subf %76, %81 : vector<16x32xf32>
    %83 = arith.mulf %82, %82 : vector<16x32xf32>
    %cst_20 = arith.constant dense<0.000000e+00> : vector<16xf32>
    %84 = vector.multi_reduction <add>, %83, %cst_20 [1] : vector<16x32xf32> to vector<16xf32>
    %85 = vector.shape_cast %84 : vector<16xf32> to vector<16x1xf32>
    %cst_21 = arith.constant 3.200000e+01 : f32
    %86 = vector.broadcast %cst_21 : f32 to vector<16x1xf32>
    %87 = arith.divf %85, %86 : vector<16x1xf32>
    %cst_22 = arith.constant 9.99999974E-6 : f32
    %88 = vector.broadcast %cst_22 : f32 to vector<16x1xf32>
    %89 = arith.addf %87, %88 : vector<16x1xf32>
    %90 = math.rsqrt %89 : vector<16x1xf32>
    %91 = vector.broadcast %90 : vector<16x1xf32> to vector<16x32xf32>
    %92 = arith.mulf %82, %91 : vector<16x32xf32>
    %93 = vector.broadcast %16 : vector<1x32xf32> to vector<16x32xf32>
    %94 = arith.mulf %92, %93 : vector<16x32xf32>
    %95 = vector.broadcast %17 : vector<1x32xf32> to vector<16x32xf32>
    %96 = arith.addf %94, %95 : vector<16x32xf32>
    %cst_23 = arith.constant dense<0.000000e+00> : vector<16x64xf32>
    %97 = tpu.matmul %96, %12, %cst_23 {dimension_numbers = #tpu.dot_dimension_numbers<[1], [0], [0], [1], [0, 0, 1, 1], [], []>} : vector<16x32xf32>, vector<32x64xf32>, vector<16x64xf32> -> vector<16x64xf32>
    %98 = vector.broadcast %18 : vector<1x64xf32> to vector<16x64xf32>
    %99 = arith.addf %97, %98 : vector<16x64xf32>
    %cst_24 = arith.constant 5.000000e-01 : f32
    %100 = vector.broadcast %cst_24 : f32 to vector<16x64xf32>
    %101 = arith.mulf %100, %99 : vector<16x64xf32>
    %cst_25 = arith.constant 0.707106769 : f32
    %102 = vector.broadcast %cst_25 : f32 to vector<16x64xf32>
    %103 = arith.mulf %99, %102 : vector<16x64xf32>
    %104 = math.erf %103 : vector<16x64xf32>
    %cst_26 = arith.constant 1.000000e+00 : f32
    %105 = vector.broadcast %cst_26 : f32 to vector<16x64xf32>
    %106 = arith.addf %105, %104 : vector<16x64xf32>
    %107 = arith.mulf %101, %106 : vector<16x64xf32>
    %cst_27 = arith.constant dense<0.000000e+00> : vector<16x32xf32>
    %108 = tpu.matmul %107, %13, %cst_27 {dimension_numbers = #tpu.dot_dimension_numbers<[1], [1], [0], [0], [0, 0, 1, 0], [], []>} : vector<16x64xf32>, vector<32x64xf32>, vector<16x32xf32> -> vector<16x32xf32>
    %109 = vector.broadcast %19 : vector<1x32xf32> to vector<16x32xf32>
    %110 = arith.addf %108, %109 : vector<16x32xf32>
    %111 = arith.addf %96, %110 : vector<16x32xf32>
    %cst_28 = arith.constant dense<0.000000e+00> : vector<16xf32>
    %112 = vector.multi_reduction <add>, %111, %cst_28 [1] : vector<16x32xf32> to vector<16xf32>
    %113 = vector.shape_cast %112 : vector<16xf32> to vector<16x1xf32>
    %cst_29 = arith.constant 3.200000e+01 : f32
    %114 = vector.broadcast %cst_29 : f32 to vector<16x1xf32>
    %115 = arith.divf %113, %114 : vector<16x1xf32>
    %116 = vector.broadcast %115 : vector<16x1xf32> to vector<16x32xf32>
    %117 = arith.subf %111, %116 : vector<16x32xf32>
    %118 = arith.mulf %117, %117 : vector<16x32xf32>
    %cst_30 = arith.constant dense<0.000000e+00> : vector<16xf32>
    %119 = vector.multi_reduction <add>, %118, %cst_30 [1] : vector<16x32xf32> to vector<16xf32>
    %120 = vector.shape_cast %119 : vector<16xf32> to vector<16x1xf32>
    %cst_31 = arith.constant 3.200000e+01 : f32
    %121 = vector.broadcast %cst_31 : f32 to vector<16x1xf32>
    %122 = arith.divf %120, %121 : vector<16x1xf32>
    %cst_32 = arith.constant 9.99999974E-6 : f32
    %123 = vector.broadcast %cst_32 : f32 to vector<16x1xf32>
    %124 = arith.addf %122, %123 : vector<16x1xf32>
    %125 = math.rsqrt %124 : vector<16x1xf32>
    %126 = vector.broadcast %125 : vector<16x1xf32> to vector<16x32xf32>
    %127 = arith.mulf %117, %126 : vector<16x32xf32>
    %128 = vector.broadcast %20 : vector<1x32xf32> to vector<16x32xf32>
    %129 = arith.mulf %127, %128 : vector<16x32xf32>
    %130 = vector.broadcast %21 : vector<1x32xf32> to vector<16x32xf32>
    %131 = arith.addf %129, %130 : vector<16x32xf32>
    %132 = vector.shape_cast %131 : vector<16x32xf32> to vector<2x8x32xf32>
    %c0_33 = arith.constant 0 : index
    %c0_34 = arith.constant 0 : index
    %c0_35 = arith.constant 0 : index
    %133 = vector.load %arg5[%c0_33, %c0_34, %c0_35] : memref<2x8x32xf32, #tpu.memory_space<vmem>>, vector<2x8x32xf32>
    tpu.vector_store %arg5[%c0_33, %c0_34, %c0_35], %132 {strides = array<i32>} : memref<2x8x32xf32, #tpu.memory_space<vmem>>, vector<2x8x32xf32>,
    return
  }
  func.func @transform_0(%arg0: i32) -> (i32, i32, i32) {
    %c0_i32 = arith.constant 0 : i32
    %c0_i32_0 = arith.constant 0 : i32
    %c0_i32_1 = arith.constant 0 : i32
    %c0_i32_2 = arith.constant 0 : i32
    return %c0_i32, %c0_i32_0, %c0_i32_1 : i32, i32, i32
  }
  func.func @transform_1(%arg0: i32) -> (i32, i32, i32) {
    %c0_i32 = arith.constant 0 : i32
    %c0_i32_0 = arith.constant 0 : i32
    %c0_i32_1 = arith.constant 0 : i32
    %c0_i32_2 = arith.constant 0 : i32
    return %c0_i32, %c0_i32_0, %c0_i32_1 : i32, i32, i32
  }
  func.func @transform_2(%arg0: i32) -> (i32, i32, i32) {
    %c0_i32 = arith.constant 0 : i32
    %c0_i32_0 = arith.constant 0 : i32
    %c0_i32_1 = arith.constant 0 : i32
    return %arg0, %c0_i32, %c0_i32_0 : i32, i32, i32
  }
  func.func @transform_3(%arg0: i32) -> (i32, i32, i32) {
    %c0_i32 = arith.constant 0 : i32
    %c0_i32_0 = arith.constant 0 : i32
    %c0_i32_1 = arith.constant 0 : i32
    return %arg0, %c0_i32, %c0_i32_0 : i32, i32, i32
  }
  func.func @transform_4(%arg0: i32) -> (i32, i32, i32) {
    %c0_i32 = arith.constant 0 : i32
    %c0_i32_0 = arith.constant 0 : i32
    %c0_i32_1 = arith.constant 0 : i32
    %c0_i32_2 = arith.constant 0 : i32
    return %c0_i32, %c0_i32_0, %c0_i32_1 : i32, i32, i32
  }
}

</mosaic_0001>

<llo_original>
// kernel: tpu_custom_call.1
$region0: #{tpu_custom_call.1}
  #allocation0 [shape = 'u32[]', space=smem, size = 0x4, offset = 0x4, fixed_abs, tag = 'smem constant byte address 0x4 - core index']
  #allocation1 [shape = 'u32[144,128]{1,0:T(1,128)}', space=vmem, size = 0x12000, scoped, tag = 'internal scratch']
  %s0 = inlined_call_operand.hbm [shape: f32[2,8,32], index: 0, kind: input, shape index: {}]
  %s1 = inlined_call_operand.hbm [shape: f32[8,8,8], index: 1, kind: input, shape index: {}]
  %s2 = inlined_call_operand.hbm [shape: f32[2,32,256], index: 2, kind: input, shape index: {}]
  %s3 = inlined_call_operand.hbm [shape: f32[2,8,96], index: 3, kind: input, shape index: {}]
  %s4 = inlined_call_operand.hbm [shape: f32[2,8,32], index: 4, kind: output, shape index: {}]
  %s5 = sld [smem:[#allocation0]]
  $region69: #{tpu_custom_call.1} parent=0
    _
  %s7 = ssub.s32 1, %s5
  %s8 = scalar_select 0, %s7, %s5
  $region1: #{tpu_custom_call.1} parent=0
    #allocation2 [shape = 'u8[8192]{0}', space=vmem, size = 0x2000, scoped, tag = 'input window, operand 0, single buffered']
    #allocation3 [shape = 's32[2]{0}', space=sflag, size = 0x8, scoped, tag = 'scoped memory for tpu_custom_call.1']
    #allocation4 [shape = 's32[2]{0}', space=sflag, size = 0x8, scoped, tag = 'scoped memory for tpu_custom_call.1']
    #allocation5 [shape = 'u8[32768]{0}', space=vmem, size = 0x8000, scoped, tag = 'input window, operand 1, single buffered']
    #allocation6 [shape = 's32[1]{0}', space=sflag, size = 0x4, scoped, tag = 'scoped memory for tpu_custom_call.1']
    #allocation7 [shape = 'u8[65536]{0}', space=vmem, size = 0x10000, scoped, tag = 'input window, operand 2']
    #allocation8 [shape = 'u8[8192]{0}', space=vmem, size = 0x2000, scoped, tag = 'input window, operand 3']
    #allocation9 [shape = 'u8[8192]{0}', space=vmem, size = 0x2000, scoped, tag = 'output window, operand 0, single buffered']
    %9 = vsyncpa [#allocation3], 0
    %10 = vsyncpa [#allocation6], 0
    %11 = vsyncpa [#allocation4], 0
    loop: start=0, step=1, limit=4
    $region2: #{tpu_custom_call.1} parent=1 // loop_pre_header
      _
    $region3: #{tpu_custom_call.1} parent=1 // loop_header
      %s13 = sphi 0, %s17
      %p14 = scmp.ge.s32.totalorder %s13, 4
      %s21 = sphi 0, %s21
      %s23 = sphi 0, %s21
      %s24 = sphi 0, %s23
      %s38 = sphi 0, %s24
      %s42 = sphi 0, %s42
      %s44 = sphi 0, %s42
      %s45 = sphi 0, %s44
      %s59 = sphi 0, %s45
      %s65 = sphi 0, %s67
      %s68 = sphi 0, %s65
      %s69 = sphi 0, %s68
      %s85 = sphi 0, %s69
      %s91 = sphi 0, %s93
      %s94 = sphi 0, %s91
      %s95 = sphi 0, %s94
      %s111 = sphi 0, %s95
      %s115 = sphi 0, %s115
      %s117 = sphi 0, %s115
      %s118 = sphi 0, %s117
      %s132 = sphi 0, %s118
    $region4: #{tpu_custom_call.1} parent=1 // loop_header_branch
      %16 = sbr.rel (%p14) target = $region8
    $region5: #{tpu_custom_call.1} parent=1 // loop_body
      %s18 = ssub.s32 %s13, 1
      %s19 = ssub.s32 %s13, 2
      %s20 = sadd.s32 %s13, 1
      %s22 = sadd.s32 %s21, 1
      %p25 = scmp.eq.s32.totalorder %s13, 1
      %p26 = scmp.ne.s32.totalorder %s21, %s23
      %p27 = scmp.eq.s32.totalorder %s13, 0
      %p28 = por %p26, %p27
      %p29 = scmp.ne.s32.totalorder %s21, %s23
      %p30 = scmp.eq.s32.totalorder %s18, 1
      %p31 = por %p29, %p30
      %p32 = scmp.ne.s32.totalorder %s23, %s24
      %p33 = scmp.eq.s32.totalorder %s18, 0
      %p34 = por %p32, %p33
      %p35 = scmp.ne.s32.totalorder %s23, %s24
      %p36 = scmp.eq.s32.totalorder %s19, 1
      %p37 = por %p35, %p36
      %p39 = scmp.ne.s32.totalorder %s24, %s38
      %p40 = scmp.eq.s32.totalorder %s19, 0
      %p41 = por %p39, %p40
      %s43 = sadd.s32 %s42, 1
      %p46 = scmp.eq.s32.totalorder %s13, 1
      %p47 = scmp.ne.s32.totalorder %s42, %s44
      %p48 = scmp.eq.s32.totalorder %s13, 0
      %p49 = por %p47, %p48
      %p50 = scmp.ne.s32.totalorder %s42, %s44
      %p51 = scmp.eq.s32.totalorder %s18, 1
      %p52 = por %p50, %p51
      %p53 = scmp.ne.s32.totalorder %s44, %s45
      %p54 = scmp.eq.s32.totalorder %s18, 0
      %p55 = por %p53, %p54
      %p56 = scmp.ne.s32.totalorder %s44, %s45
      %p57 = scmp.eq.s32.totalorder %s19, 1
      %p58 = por %p56, %p57
      %p60 = scmp.ne.s32.totalorder %s45, %s59
      %p61 = scmp.eq.s32.totalorder %s19, 0
      %p62 = por %p60, %p61
      %s63 = ssub.s32 %s13, %s20
      %p64 = scmp.eq.s32.totalorder %s63, 0
      %s66 = sadd.s32 %s65, 1
      %s67 = scalar_select %p64, %s65, %s66
      %p70 = pneg %p64
      %p71 = scmp.eq.s32.totalorder %s13, 1
      %p72 = por %p70, %p71
      %p73 = scmp.ne.s32.totalorder %s65, %s68
      %p74 = scmp.eq.s32.totalorder %s13, 0
      %p75 = por %p73, %p74
      %p76 = scmp.ne.s32.totalorder %s65, %s68
      %p77 = scmp.eq.s32.totalorder %s18, 1
      %p78 = por %p76, %p77
      %p79 = scmp.ne.s32.totalorder %s68, %s69
      %p80 = scmp.eq.s32.totalorder %s18, 0
      %p81 = por %p79, %p80
      %p82 = scmp.ne.s32.totalorder %s68, %s69
      %p83 = scmp.eq.s32.totalorder %s19, 1
      %p84 = por %p82, %p83
      %p86 = scmp.ne.s32.totalorder %s69, %s85
      %p87 = scmp.eq.s32.totalorder %s19, 0
      %p88 = por %p86, %p87
      %s89 = ssub.s32 %s13, %s20
      %p90 = scmp.eq.s32.totalorder %s89, 0
      %s92 = sadd.s32 %s91, 1
      %s93 = scalar_select %p90, %s91, %s92
      %p96 = pneg %p90
      %p97 = scmp.eq.s32.totalorder %s13, 1
      %p98 = por %p96, %p97
      %p99 = scmp.ne.s32.totalorder %s91, %s94
      %p100 = scmp.eq.s32.totalorder %s13, 0
      %p101 = por %p99, %p100
      %p102 = scmp.ne.s32.totalorder %s91, %s94
      %p103 = scmp.eq.s32.totalorder %s18, 1
      %p104 = por %p102, %p103
      %p105 = scmp.ne.s32.totalorder %s94, %s95
      %p106 = scmp.eq.s32.totalorder %s18, 0
      %p107 = por %p105, %p106
      %p108 = scmp.ne.s32.totalorder %s94, %s95
      %p109 = scmp.eq.s32.totalorder %s19, 1
      %p110 = por %p108, %p109
      %p112 = scmp.ne.s32.totalorder %s95, %s111
      %p113 = scmp.eq.s32.totalorder %s19, 0
      %p114 = por %p112, %p113
      %s116 = sadd.s32 %s115, 1
      %p119 = scmp.eq.s32.totalorder %s13, 1
      %p120 = scmp.ne.s32.totalorder %s115, %s117
      %p121 = scmp.eq.s32.totalorder %s13, 0
      %p122 = por %p120, %p121
      %p123 = scmp.ne.s32.totalorder %s115, %s117
      %p124 = scmp.eq.s32.totalorder %s18, 1
      %p125 = por %p123, %p124
      %p126 = scmp.ne.s32.totalorder %s117, %s118
      %p127 = scmp.eq.s32.totalorder %s18, 0
      %p128 = por %p126, %p127
      %p129 = scmp.ne.s32.totalorder %s117, %s118
      %p130 = scmp.eq.s32.totalorder %s19, 1
      %p131 = por %p129, %p130
      %p133 = scmp.ne.s32.totalorder %s118, %s132
      %p134 = scmp.eq.s32.totalorder %s19, 0
      %p135 = por %p133, %p134
      %p136 = scmp.le.s32.totalorder 1, %s13
      %p137 = scmp.lt.s32.totalorder %s13, 3
      %p138 = pnand %p136, %p137
      %p139 = pneg %p138
      // Predicated region
      $region9: #{tpu_custom_call.1} parent=5 // pred_check
        _
      $region10: #{tpu_custom_call.1} parent=5 // pred_check_branch
        %141 = sbr.rel (%p138) target = $region12
      $region11: #{tpu_custom_call.1} parent=5 // pred_region
        %s142 = ssub.s32 %s13, 1
        // Predicated region
        $region13: #{tpu_custom_call.1} parent=11 // pred_check
          %p143 = pneg %p34
        $region14: #{tpu_custom_call.1} parent=11 // pred_check_branch
          %145 = sbr.rel (%p143) target = $region16
        $region15: #{tpu_custom_call.1} parent=11 // pred_region
          %s147 = ssub.s32 256, 256
          %148 = vsyncadd [#allocation3], %s147
          %s149 = sshll.u32 [#allocation2], 4
          %s150 = int_to_ptr.vmem [resolvable:$true] %s149
          %155 = dma.hbm_to_vmem [thread:$0]  %s0, 256, %s150, [#allocation3], 128, 128, 8
        $region16: #{tpu_custom_call.1} parent=11 // pred_fallthru
          _
        // Predicated region
        $region17: #{tpu_custom_call.1} parent=11 // pred_check
          %p156 = pneg %p55
        $region18: #{tpu_custom_call.1} parent=11 // pred_check_branch
          %158 = sbr.rel (%p156) target = $region20
        $region19: #{tpu_custom_call.1} parent=11 // pred_region
          %s160 = ssub.s32 1024, 1024
          %161 = vsyncadd [#allocation6], %s160
          %s162 = sshll.u32 [#allocation5], 4
          %s163 = int_to_ptr.vmem [resolvable:$true] %s162
          %168 = dma.hbm_to_vmem [thread:$0]  %s1, 1024, %s163, [#allocation6], 128, 128, 8
        $region20: #{tpu_custom_call.1} parent=11 // pred_fallthru
          _
      $region12: #{tpu_custom_call.1} parent=5 // pred_fallthru
        _
      %p169 = scmp.lt.s32.totalorder %s13, 2
      // Predicated region
      $region21: #{tpu_custom_call.1} parent=5 // pred_check
        %p170 = pneg %p169
      $region22: #{tpu_custom_call.1} parent=5 // pred_check_branch
        %172 = sbr.rel (%p170) target = $region24
      $region23: #{tpu_custom_call.1} parent=5 // pred_region
        // Predicated region
        $region25: #{tpu_custom_call.1} parent=23 // pred_check
          %p173 = pneg %p75
        $region26: #{tpu_custom_call.1} parent=23 // pred_check_branch
          %175 = sbr.rel (%p173) target = $region28
        $region27: #{tpu_custom_call.1} parent=23 // pred_region
          %s176 = sand.u32 %s13, 1
          %s177 = scalar_lea.sflag [#allocation3], %s176
          %s178 = sand.u32 %s65, 1
          %s179 = smul.addr %s178, 64
          %s180 = scalar_lea.vmem [#allocation7], %s179
          %s182 = ssub.s32 1024, 1024
          %183 = vsyncadd %s177, %s182
          %s184 = smul.addr %s13, 8
          %s185 = smul.addr %s184, 128
          %s186 = scalar_lea.hbm %s2, %s185
          %s187 = sshll.u32 %s180, 4
          %s188 = int_to_ptr.vmem [resolvable:$true] %s187
          %193 = dma.hbm_to_vmem [thread:$0]  %s186, 1024, %s188, %s177, 256, 256, 16
        $region28: #{tpu_custom_call.1} parent=23 // pred_fallthru
          _
        // Predicated region
        $region29: #{tpu_custom_call.1} parent=23 // pred_check
          %p194 = pneg %p101
        $region30: #{tpu_custom_call.1} parent=23 // pred_check_branch
          %196 = sbr.rel (%p194) target = $region32
        $region31: #{tpu_custom_call.1} parent=23 // pred_region
          %s197 = sand.u32 %s13, 1
          %s198 = scalar_lea.sflag [#allocation3], %s197
          %s199 = sand.u32 %s91, 1
          %s200 = smul.addr %s199, 8
          %s201 = scalar_lea.vmem [#allocation8], %s200
          %s203 = ssub.s32 128, 128
          %204 = vsyncadd %s198, %s203
          %s205 = smul.addr %s13, 128
          %s206 = scalar_lea.hbm %s3, %s205
          %s208 = sshll.u32 %s201, 4
          %s209 = int_to_ptr.vmem [resolvable:$true] %s208
          %211 = dma.hbm_to_vmem [thread:$0]  %s206, 128, %s209, %s198
        $region32: #{tpu_custom_call.1} parent=23 // pred_fallthru
          _
      $region24: #{tpu_custom_call.1} parent=5 // pred_fallthru
        _
      %p212 = scmp.le.s32.totalorder 1, %s13
      %p213 = scmp.lt.s32.totalorder %s13, 3
      %p214 = pnand %p212, %p213
      %p215 = pneg %p214
      // Predicated region
      $region33: #{tpu_custom_call.1} parent=5 // pred_check
        _
      $region34: #{tpu_custom_call.1} parent=5 // pred_check_branch
        %217 = sbr.rel (%p214) target = $region36
      $region35: #{tpu_custom_call.1} parent=5 // pred_region
        %s218 = ssub.s32 %s13, 1
        // Predicated region
        $region37: #{tpu_custom_call.1} parent=35 // pred_check
          %p219 = pneg %p34
        $region38: #{tpu_custom_call.1} parent=35 // pred_check_branch
          %221 = sbr.rel (%p219) target = $region40
        $region39: #{tpu_custom_call.1} parent=35 // pred_region
          %222 = dma.done [#allocation3], 256
        $region40: #{tpu_custom_call.1} parent=35 // pred_fallthru
          _
        // Predicated region
        $region41: #{tpu_custom_call.1} parent=35 // pred_check
          %p223 = pneg %p55
        $region42: #{tpu_custom_call.1} parent=35 // pred_check_branch
          %225 = sbr.rel (%p223) target = $region44
        $region43: #{tpu_custom_call.1} parent=35 // pred_region
          %226 = dma.done [#allocation6], 1024
        $region44: #{tpu_custom_call.1} parent=35 // pred_fallthru
          _
        %s227 = sand.u32 %s18, 1
        %s228 = scalar_lea.sflag [#allocation3], %s227
        %s229 = sand.u32 %s68, 1
        %s230 = smul.addr %s229, 64
        %s231 = scalar_lea.vmem [#allocation7], %s230
        // Predicated region
        $region45: #{tpu_custom_call.1} parent=35 // pred_check
          %p232 = pneg %p81
        $region46: #{tpu_custom_call.1} parent=35 // pred_check_branch
          %234 = sbr.rel (%p232) target = $region48
        $region47: #{tpu_custom_call.1} parent=35 // pred_region
          %235 = dma.done %s228, 1024
        $region48: #{tpu_custom_call.1} parent=35 // pred_fallthru
          _
        %s236 = sand.u32 %s18, 1
        %s237 = scalar_lea.sflag [#allocation3], %s236
        %s238 = sand.u32 %s94, 1
        %s239 = smul.addr %s238, 8
        %s240 = scalar_lea.vmem [#allocation8], %s239
        // Predicated region
        $region49: #{tpu_custom_call.1} parent=35 // pred_check
          %p241 = pneg %p107
        $region50: #{tpu_custom_call.1} parent=35 // pred_check_branch
          %243 = sbr.rel (%p241) target = $region52
        $region51: #{tpu_custom_call.1} parent=35 // pred_region
          %244 = dma.done %s237, 128
        $region52: #{tpu_custom_call.1} parent=35 // pred_fallthru
          _
        %p245 = pneg %p34
        %p246 = pneg %p31
        %p247 = pneg %p55
        %p248 = pneg %p52
        %s249 = sand.u32 %s18, 1
        %s250 = scalar_lea.sflag [#allocation3], %s249
        %s251 = sand.u32 %s68, 1
        %s252 = smul.addr %s251, 64
        %s253 = scalar_lea.vmem [#allocation7], %s252
        %p254 = pneg %p81
        %p255 = pneg %p78
        %s256 = sand.u32 %s18, 1
        %s257 = scalar_lea.sflag [#allocation3], %s256
        %s258 = sand.u32 %s94, 1
        %s259 = smul.addr %s258, 8
        %s260 = scalar_lea.vmem [#allocation8], %s259
        %p261 = pneg %p107
        %p262 = pneg %p104
        %p263 = pneg %p128
        %p264 = pneg %p125
        %p265 = scmp.eq.s32.totalorder %s18, 0
        // Predicated region
        $region53: #{tpu_custom_call.1} parent=35 // pred_check
          %p266 = pneg %p265
        $region54: #{tpu_custom_call.1} parent=35 // pred_check_branch
          %268 = sbr.rel (%p266) target = $region56
        $region55: #{tpu_custom_call.1} parent=35 // pred_region
          %v269 = vld [vmem:[#allocation2] sm:$0xff]
          %v270 = vld [vmem:[#allocation2 + $0x8] sm:$0xff]
          %vm271 = vcmask 261120
          %272 = vst.msk [vmem:[#allocation9] sm:$0xff] %vm271, %v269
          %273 = vst.msk [vmem:[#allocation9 + $0x8] sm:$0xff] %vm271, %v270
        $region56: #{tpu_custom_call.1} parent=35 // pred_fallthru
          _
        %v274 = vld [vmem:[#allocation9] sm:$0xff]
        %v275 = vld [vmem:[#allocation9 + $0x8] sm:$0xff]
        %v276 = vld [vmem:[#allocation5] sm:$0xff]
        %v277 = vld [vmem:[#allocation5 + $0x8] sm:$0xff]
        %v278 = vld [vmem:[#allocation5 + $0x10] sm:$0xff]
        %v279 = vld [vmem:[#allocation5 + $0x18] sm:$0xff]
        %v280 = vld [vmem:[#allocation5 + $0x20] sm:$0xff]
        %v281 = vld [vmem:[#allocation5 + $0x28] sm:$0xff]
        %v282 = vld [vmem:[#allocation5 + $0x30] sm:$0xff]
        %v283 = vld [vmem:[#allocation5 + $0x38] sm:$0xff]
        %v284 = vld [vmem:[%s231] sm:$0xff]
        %v285 = vld [vmem:[%s231 + $0x8] sm:$0xff]
        %v286 = vld [vmem:[%s231 + $0x10] sm:$0xff]
        %v287 = vld [vmem:[%s231 + $0x18] sm:$0xff]
        %v288 = vld [vmem:[%s231 + $0x20] sm:$0xff]
        %v289 = vld [vmem:[%s231 + $0x28] sm:$0xff]
        %v290 = vld [vmem:[%s231 + $0x30] sm:$0xff]
        %v291 = vld [vmem:[%s231 + $0x38] sm:$0xff]
        %v292 = vld [vmem:[%s240] sm:$0xff]
        %v293 = vlaneseq
        %v294 = vshrl.u32 %v293, 7
        %v295 = vsub.s32 0, %v294
        %v296 = vrot.slane %v292, %v295
        %vm297 = vcmask 261120
        %v299 = vsel %vm297, %v274, 0
        %v302 = vsel %vm297, %v275, 0
        %304 = vmatprep.subr.mxu0 0.0
        %305 = vmatpush1.msra.mxu0 %v284
        %306 = vmatprep.subr.mxu0 0.0
        %307 = vmatpush1.msra.mxu0 %v286
        %308 = vmatprep.subr.mxu0 0.0
        %309 = vmatpush1.msra.mxu0 %v288
        %310 = vmatprep.subr.mxu0 0.0
        %311 = vmatpush1.msra.mxu0 %v290
        %312 = vmatprep.subr.mxu0 0.0
        %313 = vmatpush1.msra.mxu0 0.0
        %314 = vmatprep.subr.mxu0 0.0
        %315 = vmatpush1.msra.mxu0 0.0
        %316 = vmatprep.subr.mxu0 0.0
        %317 = vmatpush1.msra.mxu0 0.0
        %318 = vmatprep.subr.mxu0 0.0
        %319 = vmatpush1.msra.mxu0 0.0
        %320 = vmatprep.subr.mxu0 0.0
        %321 = vmatpush1.msra.mxu0 0.0
        %322 = vmatprep.subr.mxu0 0.0
        %323 = vmatpush1.msra.mxu0 0.0
        %324 = vmatprep.subr.mxu0 0.0
        %325 = vmatpush1.msra.mxu0 0.0
        %326 = vmatprep.subr.mxu0 0.0
        %327 = vmatpush1.msra.mxu0 0.0
        %328 = vmatprep.subr.mxu0 0.0
        %329 = vmatpush1.msra.mxu0 0.0
        %330 = vmatprep.subr.mxu0 0.0
        %331 = vmatpush1.msra.mxu0 0.0
        %332 = vmatprep.subr.mxu0 0.0
        %333 = vmatpush1.msra.mxu0 0.0
        %334 = vmatprep.subr.mxu0 0.0
        %335 = vmatpush1.msra.mxu0 0.0
        %336 = vmatprep.subr.mxu0 0.0
        %337 = vmatpush1.msra.mxu0 0.0
        %338 = vmatprep.subr.mxu0 0.0
        %339 = vmatpush1.msra.mxu0 0.0
        %340 = vmatprep.subr.mxu0 0.0
        %341 = vmatpush1.msra.mxu0 0.0
        %342 = vmatprep.subr.mxu0 0.0
        %343 = vmatpush1.msra.mxu0 0.0
        %344 = vmatprep.subr.mxu0 0.0
        %345 = vmatpush1.msra.mxu0 0.0
        %346 = vmatprep.subr.mxu0 0.0
        %347 = vmatpush1.msra.mxu0 0.0
        %348 = vmatprep.subr.mxu0 0.0
        %349 = vmatpush1.msra.mxu0 0.0
        %350 = vmatprep.subr.mxu0 0.0
        %351 = vmatpush1.msra.mxu0 0.0
        %352 = vmatprep.subr.mxu0 0.0
        %353 = vmatpush1.msra.mxu0 0.0
        %354 = vmatprep.subr.mxu0 0.0
        %355 = vmatpush1.msra.mxu0 0.0
        %356 = vmatprep.subr.mxu0 0.0
        %357 = vmatpush1.msra.mxu0 0.0
        %358 = vmatprep.subr.mxu0 0.0
        %359 = vmatpush1.msra.mxu0 0.0
        %360 = vmatprep.subr.mxu0 0.0
        %361 = vmatpush1.msra.mxu0 0.0
        %362 = vmatprep.subr.mxu0 0.0
        %363 = vmatpush1.msra.mxu0 0.0
        %364 = vmatprep.subr.mxu0 0.0
        %365 = vmatpush1.msra.mxu0 0.0
        %366 = vmatprep.subr.mxu0 0.0
        %367 = vmatpush1.msra.mxu0 0.0
        %368 = vmatprep.mubr.f32.mxu0 0.0
        %369 = vmatmul.mubr.f32.gmra.mrb[0].mxu0 %v299
        %v370 = vpop.f32.mrb[0].mxu0
        %v371 = vadd.f32 %v296, %v370
        %v372 = vpop.f32.mrb[0].mxu0
        %373 = vmatprep.mubr.f32.mxu0 0.0
        %374 = vmatmul.mubr.f32.gmra.mrb[0].mxu0 %v302
        %v375 = vpop.f32.mrb[0].mxu0
        %v376 = vadd.f32 %v296, %v375
        %v377 = vpop.f32.mrb[0].mxu0
        %378 = vdwg.mxu0
        %381 = vrot.lane.b32.xlu0 %v371, 120
        %v382 = vpop.permute.xlu0 %381
        %383 = vrot.lane.b32.xlu0 %v376, 120
        %v384 = vpop.permute.xlu0 %383
        %385 = vrot.lane.b32.xlu0 %v371, 112
        %v386 = vpop.permute.xlu0 %385
        %387 = vrot.lane.b32.xlu0 %v376, 112
        %v388 = vpop.permute.xlu0 %387
        %389 = vrot.lane.b32.xlu0 %v371, 104
        %v390 = vpop.permute.xlu0 %389
        %391 = vrot.lane.b32.xlu0 %v376, 104
        %v392 = vpop.permute.xlu0 %391
        %393 = vrot.lane.b32.xlu0 %v371, 96
        %v394 = vpop.permute.xlu0 %393
        %vm395 = vcmask 64512
        %v396 = vsel %vm395, %v371, 0
        %v398 = vsel %vm395, %v394, 0
        %400 = vmatprep.subr.mxu0 0.0
        %401 = vmatpush1.xpose.msra.mxu0 %v398
        %402 = vmatprep.subr.mxu0 0.0
        %403 = vmatpush1.xpose.msra.mxu0 0.0
        %404 = vmatprep.subr.mxu0 0.0
        %405 = vmatpush1.xpose.msra.mxu0 0.0
        %406 = vmatprep.subr.mxu0 0.0
        %407 = vmatpush1.xpose.msra.mxu0 0.0
        %408 = vmatprep.subr.mxu0 0.0
        %409 = vmatpush1.xpose.msra.mxu0 0.0
        %410 = vmatprep.subr.mxu0 0.0
        %411 = vmatpush1.xpose.msra.mxu0 0.0
        %412 = vmatprep.subr.mxu0 0.0
        %413 = vmatpush1.xpose.msra.mxu0 0.0
        %414 = vmatprep.subr.mxu0 0.0
        %415 = vmatpush1.xpose.msra.mxu0 0.0
        %416 = vmatprep.subr.mxu0 0.0
        %417 = vmatpush1.xpose.msra.mxu0 0.0
        %418 = vmatprep.subr.mxu0 0.0
        %419 = vmatpush1.xpose.msra.mxu0 0.0
        %420 = vmatprep.subr.mxu0 0.0
        %421 = vmatpush1.xpose.msra.mxu0 0.0
        %422 = vmatprep.subr.mxu0 0.0
        %423 = vmatpush1.xpose.msra.mxu0 0.0
        %424 = vmatprep.subr.mxu0 0.0
        %425 = vmatpush1.xpose.msra.mxu0 0.0
        %426 = vmatprep.subr.mxu0 0.0
        %427 = vmatpush1.xpose.msra.mxu0 0.0
        %428 = vmatprep.subr.mxu0 0.0
        %429 = vmatpush1.xpose.msra.mxu0 0.0
        %430 = vmatprep.subr.mxu0 0.0
        %431 = vmatpush1.xpose.msra.mxu0 0.0
        %432 = vmatprep.subr.mxu0 0.0
        %433 = vmatpush1.xpose.msra.mxu0 0.0
        %434 = vmatprep.subr.mxu0 0.0
        %435 = vmatpush1.xpose.msra.mxu0 0.0
        %436 = vmatprep.subr.mxu0 0.0
        %437 = vmatpush1.xpose.msra.mxu0 0.0
        %438 = vmatprep.subr.mxu0 0.0
        %439 = vmatpush1.xpose.msra.mxu0 0.0
        %440 = vmatprep.subr.mxu0 0.0
        %441 = vmatpush1.xpose.msra.mxu0 0.0
        %442 = vmatprep.subr.mxu0 0.0
        %443 = vmatpush1.xpose.msra.mxu0 0.0
        %444 = vmatprep.subr.mxu0 0.0
        %445 = vmatpush1.xpose.msra.mxu0 0.0
        %446 = vmatprep.subr.mxu0 0.0
        %447 = vmatpush1.xpose.msra.mxu0 0.0
        %448 = vmatprep.subr.mxu0 0.0
        %449 = vmatpush1.xpose.msra.mxu0 0.0
        %450 = vmatprep.subr.mxu0 0.0
        %451 = vmatpush1.xpose.msra.mxu0 0.0
        %452 = vmatprep.subr.mxu0 0.0
        %453 = vmatpush1.xpose.msra.mxu0 0.0
        %454 = vmatprep.subr.mxu0 0.0
        %455 = vmatpush1.xpose.msra.mxu0 0.0
        %456 = vmatprep.subr.mxu0 0.0
        %457 = vmatpush1.xpose.msra.mxu0 0.0
        %458 = vmatprep.subr.mxu0 0.0
        %459 = vmatpush1.xpose.msra.mxu0 0.0
        %460 = vmatprep.subr.mxu0 0.0
        %461 = vmatpush1.xpose.msra.mxu0 0.0
        %462 = vmatprep.subr.mxu0 0.0
        %463 = vmatpush1.xpose.msra.mxu0 0.0
        %464 = vmatprep.mubr.f32.mxu0 0.0
        %465 = vmatmul.mubr.f32.gmra.mrb[0].mxu0 %v396
        %v466 = vpop.f32.mrb[0].mxu0
        %v467 = vadd.f32 0.0, %v466
        %v468 = vpop.f32.mrb[0].mxu0
        %469 = vdwg.mxu0
        %470 = vrot.lane.b32.xlu0 %v376, 96
        %v471 = vpop.permute.xlu0 %470
        %v472 = vsel %vm395, %v376, 0
        %v474 = vsel %vm395, %v471, 0
        %476 = vmatprep.subr.mxu0 0.0
        %477 = vmatpush1.xpose.msra.mxu0 %v474
        %478 = vmatprep.subr.mxu0 0.0
        %479 = vmatpush1.xpose.msra.mxu0 0.0
        %480 = vmatprep.subr.mxu0 0.0
        %481 = vmatpush1.xpose.msra.mxu0 0.0
        %482 = vmatprep.subr.mxu0 0.0
        %483 = vmatpush1.xpose.msra.mxu0 0.0
        %484 = vmatprep.subr.mxu0 0.0
        %485 = vmatpush1.xpose.msra.mxu0 0.0
        %486 = vmatprep.subr.mxu0 0.0
        %487 = vmatpush1.xpose.msra.mxu0 0.0
        %488 = vmatprep.subr.mxu0 0.0
        %489 = vmatpush1.xpose.msra.mxu0 0.0
        %490 = vmatprep.subr.mxu0 0.0
        %491 = vmatpush1.xpose.msra.mxu0 0.0
        %492 = vmatprep.subr.mxu0 0.0
        %493 = vmatpush1.xpose.msra.mxu0 0.0
        %494 = vmatprep.subr.mxu0 0.0
        %495 = vmatpush1.xpose.msra.mxu0 0.0
        %496 = vmatprep.subr.mxu0 0.0
        %497 = vmatpush1.xpose.msra.mxu0 0.0
        %498 = vmatprep.subr.mxu0 0.0
        %499 = vmatpush1.xpose.msra.mxu0 0.0
        %500 = vmatprep.subr.mxu0 0.0
        %501 = vmatpush1.xpose.msra.mxu0 0.0
        %502 = vmatprep.subr.mxu0 0.0
        %503 = vmatpush1.xpose.msra.mxu0 0.0
        %504 = vmatprep.subr.mxu0 0.0
        %505 = vmatpush1.xpose.msra.mxu0 0.0
        %506 = vmatprep.subr.mxu0 0.0
        %507 = vmatpush1.xpose.msra.mxu0 0.0
        %508 = vmatprep.subr.mxu0 0.0
        %509 = vmatpush1.xpose.msra.mxu0 0.0
        %510 = vmatprep.subr.mxu0 0.0
        %511 = vmatpush1.xpose.msra.mxu0 0.0
        %512 = vmatprep.subr.mxu0 0.0
        %513 = vmatpush1.xpose.msra.mxu0 0.0
        %514 = vmatprep.subr.mxu0 0.0
        %515 = vmatpush1.xpose.msra.mxu0 0.0
        %516 = vmatprep.subr.mxu0 0.0
        %517 = vmatpush1.xpose.msra.mxu0 0.0
        %518 = vmatprep.subr.mxu0 0.0
        %519 = vmatpush1.xpose.msra.mxu0 0.0
        %520 = vmatprep.subr.mxu0 0.0
        %521 = vmatpush1.xpose.msra.mxu0 0.0
        %522 = vmatprep.subr.mxu0 0.0
        %523 = vmatpush1.xpose.msra.mxu0 0.0
        %524 = vmatprep.subr.mxu0 0.0
        %525 = vmatpush1.xpose.msra.mxu0 0.0
        %526 = vmatprep.subr.mxu0 0.0
        %527 = vmatpush1.xpose.msra.mxu0 0.0
        %528 = vmatprep.subr.mxu0 0.0
        %529 = vmatpush1.xpose.msra.mxu0 0.0
        %530 = vmatprep.subr.mxu0 0.0
        %531 = vmatpush1.xpose.msra.mxu0 0.0
        %532 = vmatprep.subr.mxu0 0.0
        %533 = vmatpush1.xpose.msra.mxu0 0.0
        %534 = vmatprep.subr.mxu0 0.0
        %535 = vmatpush1.xpose.msra.mxu0 0.0
        %536 = vmatprep.subr.mxu0 0.0
        %537 = vmatpush1.xpose.msra.mxu0 0.0
        %538 = vmatprep.subr.mxu0 0.0
        %539 = vmatpush1.xpose.msra.mxu0 0.0
        %540 = vmatprep.mubr.f32.mxu0 0.0
        %541 = vmatmul.mubr.f32.gmra.mrb[0].mxu0 %v472
        %v542 = vpop.f32.mrb[0].mxu0
        %v543 = vadd.f32 0.0, %v542
        %v544 = vpop.f32.mrb[0].mxu0
        %545 = vdwg.mxu0
        %546 = vrot.lane.b32.xlu0 %v382, 96
        %v547 = vpop.permute.xlu0 %546
        %v548 = vsel %vm395, %v382, 0
        %v550 = vsel %vm395, %v547, 0
        %552 = vmatprep.subr.mxu0 0.0
        %553 = vmatpush1.xpose.msra.mxu0 %v550
        %554 = vmatprep.subr.mxu0 0.0
        %555 = vmatpush1.xpose.msra.mxu0 0.0
        %556 = vmatprep.subr.mxu0 0.0
        %557 = vmatpush1.xpose.msra.mxu0 0.0
        %558 = vmatprep.subr.mxu0 0.0
        %559 = vmatpush1.xpose.msra.mxu0 0.0
        %560 = vmatprep.subr.mxu0 0.0
        %561 = vmatpush1.xpose.msra.mxu0 0.0
        %562 = vmatprep.subr.mxu0 0.0
        %563 = vmatpush1.xpose.msra.mxu0 0.0
        %564 = vmatprep.subr.mxu0 0.0
        %565 = vmatpush1.xpose.msra.mxu0 0.0
        %566 = vmatprep.subr.mxu0 0.0
        %567 = vmatpush1.xpose.msra.mxu0 0.0
        %568 = vmatprep.subr.mxu0 0.0
        %569 = vmatpush1.xpose.msra.mxu0 0.0
        %570 = vmatprep.subr.mxu0 0.0
        %571 = vmatpush1.xpose.msra.mxu0 0.0
        %572 = vmatprep.subr.mxu0 0.0
        %573 = vmatpush1.xpose.msra.mxu0 0.0
        %574 = vmatprep.subr.mxu0 0.0
        %575 = vmatpush1.xpose.msra.mxu0 0.0
        %576 = vmatprep.subr.mxu0 0.0
        %577 = vmatpush1.xpose.msra.mxu0 0.0
        %578 = vmatprep.subr.mxu0 0.0
        %579 = vmatpush1.xpose.msra.mxu0 0.0
        %580 = vmatprep.subr.mxu0 0.0
        %581 = vmatpush1.xpose.msra.mxu0 0.0
        %582 = vmatprep.subr.mxu0 0.0
        %583 = vmatpush1.xpose.msra.mxu0 0.0
        %584 = vmatprep.subr.mxu0 0.0
        %585 = vmatpush1.xpose.msra.mxu0 0.0
        %586 = vmatprep.subr.mxu0 0.0
        %587 = vmatpush1.xpose.msra.mxu0 0.0
        %588 = vmatprep.subr.mxu0 0.0
        %589 = vmatpush1.xpose.msra.mxu0 0.0
        %590 = vmatprep.subr.mxu0 0.0
        %591 = vmatpush1.xpose.msra.mxu0 0.0
        %592 = vmatprep.subr.mxu0 0.0
        %593 = vmatpush1.xpose.msra.mxu0 0.0
        %594 = vmatprep.subr.mxu0 0.0
        %595 = vmatpush1.xpose.msra.mxu0 0.0
        %596 = vmatprep.subr.mxu0 0.0
        %597 = vmatpush1.xpose.msra.mxu0 0.0
        %598 = vmatprep.subr.mxu0 0.0
        %599 = vmatpush1.xpose.msra.mxu0 0.0
        %600 = vmatprep.subr.mxu0 0.0
        %601 = vmatpush1.xpose.msra.mxu0 0.0
        %602 = vmatprep.subr.mxu0 0.0
        %603 = vmatpush1.xpose.msra.mxu0 0.0
        %604 = vmatprep.subr.mxu0 0.0
        %605 = vmatpush1.xpose.msra.mxu0 0.0
        %606 = vmatprep.subr.mxu0 0.0
        %607 = vmatpush1.xpose.msra.mxu0 0.0
        %608 = vmatprep.subr.mxu0 0.0
        %609 = vmatpush1.xpose.msra.mxu0 0.0
        %610 = vmatprep.subr.mxu0 0.0
        %611 = vmatpush1.xpose.msra.mxu0 0.0
        %612 = vmatprep.subr.mxu0 0.0
        %613 = vmatpush1.xpose.msra.mxu0 0.0
        %614 = vmatprep.subr.mxu0 0.0
        %615 = vmatpush1.xpose.msra.mxu0 0.0
        %616 = vmatprep.mubr.f32.mxu0 0.0
        %617 = vmatmul.mubr.f32.gmra.mrb[0].mxu0 %v548
        %v618 = vpop.f32.mrb[0].mxu0
        %v619 = vadd.f32 0.0, %v618
        %v620 = vpop.f32.mrb[0].mxu0
        %621 = vdwg.mxu0
        %622 = vrot.lane.b32.xlu0 %v384, 96
        %v623 = vpop.permute.xlu0 %622
        %v624 = vsel %vm395, %v384, 0
        %v626 = vsel %vm395, %v623, 0
        %628 = vmatprep.subr.mxu0 0.0
        %629 = vmatpush1.xpose.msra.mxu0 %v626
        %630 = vmatprep.subr.mxu0 0.0
        %631 = vmatpush1.xpose.msra.mxu0 0.0
        %632 = vmatprep.subr.mxu0 0.0
        %633 = vmatpush1.xpose.msra.mxu0 0.0
        %634 = vmatprep.subr.mxu0 0.0
        %635 = vmatpush1.xpose.msra.mxu0 0.0
        %636 = vmatprep.subr.mxu0 0.0
        %637 = vmatpush1.xpose.msra.mxu0 0.0
        %638 = vmatprep.subr.mxu0 0.0
        %639 = vmatpush1.xpose.msra.mxu0 0.0
        %640 = vmatprep.subr.mxu0 0.0
        %641 = vmatpush1.xpose.msra.mxu0 0.0
        %642 = vmatprep.subr.mxu0 0.0
        %643 = vmatpush1.xpose.msra.mxu0 0.0
        %644 = vmatprep.subr.mxu0 0.0
        %645 = vmatpush1.xpose.msra.mxu0 0.0
        %646 = vmatprep.subr.mxu0 0.0
        %647 = vmatpush1.xpose.msra.mxu0 0.0
        %648 = vmatprep.subr.mxu0 0.0
        %649 = vmatpush1.xpose.msra.mxu0 0.0
        %650 = vmatprep.subr.mxu0 0.0
        %651 = vmatpush1.xpose.msra.mxu0 0.0
        %652 = vmatprep.subr.mxu0 0.0
        %653 = vmatpush1.xpose.msra.mxu0 0.0
        %654 = vmatprep.subr.mxu0 0.0
        %655 = vmatpush1.xpose.msra.mxu0 0.0
        %656 = vmatprep.subr.mxu0 0.0
        %657 = vmatpush1.xpose.msra.mxu0 0.0
        %658 = vmatprep.subr.mxu0 0.0
        %659 = vmatpush1.xpose.msra.mxu0 0.0
        %660 = vmatprep.subr.mxu0 0.0
        %661 = vmatpush1.xpose.msra.mxu0 0.0
        %662 = vmatprep.subr.mxu0 0.0
        %663 = vmatpush1.xpose.msra.mxu0 0.0
        %664 = vmatprep.subr.mxu0 0.0
        %665 = vmatpush1.xpose.msra.mxu0 0.0
        %666 = vmatprep.subr.mxu0 0.0
        %667 = vmatpush1.xpose.msra.mxu0 0.0
        %668 = vmatprep.subr.mxu0 0.0
        %669 = vmatpush1.xpose.msra.mxu0 0.0
        %670 = vmatprep.subr.mxu0 0.0
        %671 = vmatpush1.xpose.msra.mxu0 0.0
        %672 = vmatprep.subr.mxu0 0.0
        %673 = vmatpush1.xpose.msra.mxu0 0.0
        %674 = vmatprep.subr.mxu0 0.0
        %675 = vmatpush1.xpose.msra.mxu0 0.0
        %676 = vmatprep.subr.mxu0 0.0
        %677 = vmatpush1.xpose.msra.mxu0 0.0
        %678 = vmatprep.subr.mxu0 0.0
        %679 = vmatpush1.xpose.msra.mxu0 0.0
        %680 = vmatprep.subr.mxu0 0.0
        %681 = vmatpush1.xpose.msra.mxu0 0.0
        %682 = vmatprep.subr.mxu0 0.0
        %683 = vmatpush1.xpose.msra.mxu0 0.0
        %684 = vmatprep.subr.mxu0 0.0
        %685 = vmatpush1.xpose.msra.mxu0 0.0
        %686 = vmatprep.subr.mxu0 0.0
        %687 = vmatpush1.xpose.msra.mxu0 0.0
        %688 = vmatprep.subr.mxu0 0.0
        %689 = vmatpush1.xpose.msra.mxu0 0.0
        %690 = vmatprep.subr.mxu0 0.0
        %691 = vmatpush1.xpose.msra.mxu0 0.0
        %692 = vmatprep.mubr.f32.mxu0 0.0
        %693 = vmatmul.mubr.f32.gmra.mrb[0].mxu0 %v624
        %v694 = vpop.f32.mrb[0].mxu0
        %v695 = vadd.f32 0.0, %v694
        %v696 = vpop.f32.mrb[0].mxu0
        %697 = vdwg.mxu0
        %698 = vrot.lane.b32.xlu0 %v386, 96
        %v699 = vpop.permute.xlu0 %698
        %v700 = vsel %vm395, %v386, 0
        %v702 = vsel %vm395, %v699, 0
        %704 = vmatprep.subr.mxu0 0.0
        %705 = vmatpush1.xpose.msra.mxu0 %v702
        %706 = vmatprep.subr.mxu0 0.0
        %707 = vmatpush1.xpose.msra.mxu0 0.0
        %708 = vmatprep.subr.mxu0 0.0
        %709 = vmatpush1.xpose.msra.mxu0 0.0
        %710 = vmatprep.subr.mxu0 0.0
        %711 = vmatpush1.xpose.msra.mxu0 0.0
        %712 = vmatprep.subr.mxu0 0.0
        %713 = vmatpush1.xpose.msra.mxu0 0.0
        %714 = vmatprep.subr.mxu0 0.0
        %715 = vmatpush1.xpose.msra.mxu0 0.0
        %716 = vmatprep.subr.mxu0 0.0
        %717 = vmatpush1.xpose.msra.mxu0 0.0
        %718 = vmatprep.subr.mxu0 0.0
        %719 = vmatpush1.xpose.msra.mxu0 0.0
        %720 = vmatprep.subr.mxu0 0.0
        %721 = vmatpush1.xpose.msra.mxu0 0.0
        %722 = vmatprep.subr.mxu0 0.0
        %723 = vmatpush1.xpose.msra.mxu0 0.0
        %724 = vmatprep.subr.mxu0 0.0
        %725 = vmatpush1.xpose.msra.mxu0 0.0
        %726 = vmatprep.subr.mxu0 0.0
        %727 = vmatpush1.xpose.msra.mxu0 0.0
        %728 = vmatprep.subr.mxu0 0.0
        %729 = vmatpush1.xpose.msra.mxu0 0.0
        %730 = vmatprep.subr.mxu0 0.0
        %731 = vmatpush1.xpose.msra.mxu0 0.0
        %732 = vmatprep.subr.mxu0 0.0
        %733 = vmatpush1.xpose.msra.mxu0 0.0
        %734 = vmatprep.subr.mxu0 0.0
        %735 = vmatpush1.xpose.msra.mxu0 0.0
        %736 = vmatprep.subr.mxu0 0.0
        %737 = vmatpush1.xpose.msra.mxu0 0.0
        %738 = vmatprep.subr.mxu0 0.0
        %739 = vmatpush1.xpose.msra.mxu0 0.0
        %740 = vmatprep.subr.mxu0 0.0
        %741 = vmatpush1.xpose.msra.mxu0 0.0
        %742 = vmatprep.subr.mxu0 0.0
        %743 = vmatpush1.xpose.msra.mxu0 0.0
        %744 = vmatprep.subr.mxu0 0.0
        %745 = vmatpush1.xpose.msra.mxu0 0.0
        %746 = vmatprep.subr.mxu0 0.0
        %747 = vmatpush1.xpose.msra.mxu0 0.0
        %748 = vmatprep.subr.mxu0 0.0
        %749 = vmatpush1.xpose.msra.mxu0 0.0
        %750 = vmatprep.subr.mxu0 0.0
        %751 = vmatpush1.xpose.msra.mxu0 0.0
        %752 = vmatprep.subr.mxu0 0.0
        %753 = vmatpush1.xpose.msra.mxu0 0.0
        %754 = vmatprep.subr.mxu0 0.0
        %755 = vmatpush1.xpose.msra.mxu0 0.0
        %756 = vmatprep.subr.mxu0 0.0
        %757 = vmatpush1.xpose.msra.mxu0 0.0
        %758 = vmatprep.subr.mxu0 0.0
        %759 = vmatpush1.xpose.msra.mxu0 0.0
        %760 = vmatprep.subr.mxu0 0.0
        %761 = vmatpush1.xpose.msra.mxu0 0.0
        %762 = vmatprep.subr.mxu0 0.0
        %763 = vmatpush1.xpose.msra.mxu0 0.0
        %764 = vmatprep.subr.mxu0 0.0
        %765 = vmatpush1.xpose.msra.mxu0 0.0
        %766 = vmatprep.subr.mxu0 0.0
        %767 = vmatpush1.xpose.msra.mxu0 0.0
        %768 = vmatprep.mubr.f32.mxu0 0.0
        %769 = vmatmul.mubr.f32.gmra.mrb[0].mxu0 %v700
        %v770 = vpop.f32.mrb[0].mxu0
        %v771 = vadd.f32 0.0, %v770
        %v772 = vpop.f32.mrb[0].mxu0
        %773 = vdwg.mxu0
        %774 = vrot.lane.b32.xlu0 %v388, 96
        %v775 = vpop.permute.xlu0 %774
        %v776 = vsel %vm395, %v388, 0
        %v778 = vsel %vm395, %v775, 0
        %780 = vmatprep.subr.mxu0 0.0
        %781 = vmatpush1.xpose.msra.mxu0 %v778
        %782 = vmatprep.subr.mxu0 0.0
        %783 = vmatpush1.xpose.msra.mxu0 0.0
        %784 = vmatprep.subr.mxu0 0.0
        %785 = vmatpush1.xpose.msra.mxu0 0.0
        %786 = vmatprep.subr.mxu0 0.0
        %787 = vmatpush1.xpose.msra.mxu0 0.0
        %788 = vmatprep.subr.mxu0 0.0
        %789 = vmatpush1.xpose.msra.mxu0 0.0
        %790 = vmatprep.subr.mxu0 0.0
        %791 = vmatpush1.xpose.msra.mxu0 0.0
        %792 = vmatprep.subr.mxu0 0.0
        %793 = vmatpush1.xpose.msra.mxu0 0.0
        %794 = vmatprep.subr.mxu0 0.0
        %795 = vmatpush1.xpose.msra.mxu0 0.0
        %796 = vmatprep.subr.mxu0 0.0
        %797 = vmatpush1.xpose.msra.mxu0 0.0
        %798 = vmatprep.subr.mxu0 0.0
        %799 = vmatpush1.xpose.msra.mxu0 0.0
        %800 = vmatprep.subr.mxu0 0.0
        %801 = vmatpush1.xpose.msra.mxu0 0.0
        %802 = vmatprep.subr.mxu0 0.0
        %803 = vmatpush1.xpose.msra.mxu0 0.0
        %804 = vmatprep.subr.mxu0 0.0
        %805 = vmatpush1.xpose.msra.mxu0 0.0
        %806 = vmatprep.subr.mxu0 0.0
        %807 = vmatpush1.xpose.msra.mxu0 0.0
        %808 = vmatprep.subr.mxu0 0.0
        %809 = vmatpush1.xpose.msra.mxu0 0.0
        %810 = vmatprep.subr.mxu0 0.0
        %811 = vmatpush1.xpose.msra.mxu0 0.0
        %812 = vmatprep.subr.mxu0 0.0
        %813 = vmatpush1.xpose.msra.mxu0 0.0
        %814 = vmatprep.subr.mxu0 0.0
        %815 = vmatpush1.xpose.msra.mxu0 0.0
        %816 = vmatprep.subr.mxu0 0.0
        %817 = vmatpush1.xpose.msra.mxu0 0.0
        %818 = vmatprep.subr.mxu0 0.0
        %819 = vmatpush1.xpose.msra.mxu0 0.0
        %820 = vmatprep.subr.mxu0 0.0
        %821 = vmatpush1.xpose.msra.mxu0 0.0
        %822 = vmatprep.subr.mxu0 0.0
        %823 = vmatpush1.xpose.msra.mxu0 0.0
        %824 = vmatprep.subr.mxu0 0.0
        %825 = vmatpush1.xpose.msra.mxu0 0.0
        %826 = vmatprep.subr.mxu0 0.0
        %827 = vmatpush1.xpose.msra.mxu0 0.0
        %828 = vmatprep.subr.mxu0 0.0
        %829 = vmatpush1.xpose.msra.mxu0 0.0
        %830 = vmatprep.subr.mxu0 0.0
        %831 = vmatpush1.xpose.msra.mxu0 0.0
        %832 = vmatprep.subr.mxu0 0.0
        %833 = vmatpush1.xpose.msra.mxu0 0.0
        %834 = vmatprep.subr.mxu0 0.0
        %835 = vmatpush1.xpose.msra.mxu0 0.0
        %836 = vmatprep.subr.mxu0 0.0
        %837 = vmatpush1.xpose.msra.mxu0 0.0
        %838 = vmatprep.subr.mxu0 0.0
        %839 = vmatpush1.xpose.msra.mxu0 0.0
        %840 = vmatprep.subr.mxu0 0.0
        %841 = vmatpush1.xpose.msra.mxu0 0.0
        %842 = vmatprep.subr.mxu0 0.0
        %843 = vmatpush1.xpose.msra.mxu0 0.0
        %844 = vmatprep.mubr.f32.mxu0 0.0
        %845 = vmatmul.mubr.f32.gmra.mrb[0].mxu0 %v776
        %v846 = vpop.f32.mrb[0].mxu0
        %v847 = vadd.f32 0.0, %v846
        %v848 = vpop.f32.mrb[0].mxu0
        %849 = vdwg.mxu0
        %850 = vrot.lane.b32.xlu0 %v390, 96
        %v851 = vpop.permute.xlu0 %850
        %v852 = vsel %vm395, %v390, 0
        %v854 = vsel %vm395, %v851, 0
        %856 = vmatprep.subr.mxu0 0.0
        %857 = vmatpush1.xpose.msra.mxu0 %v854
        %858 = vmatprep.subr.mxu0 0.0
        %859 = vmatpush1.xpose.msra.mxu0 0.0
        %860 = vmatprep.subr.mxu0 0.0
        %861 = vmatpush1.xpose.msra.mxu0 0.0
        %862 = vmatprep.subr.mxu0 0.0
        %863 = vmatpush1.xpose.msra.mxu0 0.0
        %864 = vmatprep.subr.mxu0 0.0
        %865 = vmatpush1.xpose.msra.mxu0 0.0
        %866 = vmatprep.subr.mxu0 0.0
        %867 = vmatpush1.xpose.msra.mxu0 0.0
        %868 = vmatprep.subr.mxu0 0.0
        %869 = vmatpush1.xpose.msra.mxu0 0.0
        %870 = vmatprep.subr.mxu0 0.0
        %871 = vmatpush1.xpose.msra.mxu0 0.0
        %872 = vmatprep.subr.mxu0 0.0
        %873 = vmatpush1.xpose.msra.mxu0 0.0
        %874 = vmatprep.subr.mxu0 0.0
        %875 = vmatpush1.xpose.msra.mxu0 0.0
        %876 = vmatprep.subr.mxu0 0.0
        %877 = vmatpush1.xpose.msra.mxu0 0.0
        %878 = vmatprep.subr.mxu0 0.0
        %879 = vmatpush1.xpose.msra.mxu0 0.0
        %880 = vmatprep.subr.mxu0 0.0
        %881 = vmatpush1.xpose.msra.mxu0 0.0
        %882 = vmatprep.subr.mxu0 0.0
        %883 = vmatpush1.xpose.msra.mxu0 0.0
        %884 = vmatprep.subr.mxu0 0.0
        %885 = vmatpush1.xpose.msra.mxu0 0.0
        %886 = vmatprep.subr.mxu0 0.0
        %887 = vmatpush1.xpose.msra.mxu0 0.0
        %888 = vmatprep.subr.mxu0 0.0
        %889 = vmatpush1.xpose.msra.mxu0 0.0
        %890 = vmatprep.subr.mxu0 0.0
        %891 = vmatpush1.xpose.msra.mxu0 0.0
        %892 = vmatprep.subr.mxu0 0.0
        %893 = vmatpush1.xpose.msra.mxu0 0.0
        %894 = vmatprep.subr.mxu0 0.0
        %895 = vmatpush1.xpose.msra.mxu0 0.0
        %896 = vmatprep.subr.mxu0 0.0
        %897 = vmatpush1.xpose.msra.mxu0 0.0
        %898 = vmatprep.subr.mxu0 0.0
        %899 = vmatpush1.xpose.msra.mxu0 0.0
        %900 = vmatprep.subr.mxu0 0.0
        %901 = vmatpush1.xpose.msra.mxu0 0.0
        %902 = vmatprep.subr.mxu0 0.0
        %903 = vmatpush1.xpose.msra.mxu0 0.0
        %904 = vmatprep.subr.mxu0 0.0
        %905 = vmatpush1.xpose.msra.mxu0 0.0
        %906 = vmatprep.subr.mxu0 0.0
        %907 = vmatpush1.xpose.msra.mxu0 0.0
        %908 = vmatprep.subr.mxu0 0.0
        %909 = vmatpush1.xpose.msra.mxu0 0.0
        %910 = vmatprep.subr.mxu0 0.0
        %911 = vmatpush1.xpose.msra.mxu0 0.0
        %912 = vmatprep.subr.mxu0 0.0
        %913 = vmatpush1.xpose.msra.mxu0 0.0
        %914 = vmatprep.subr.mxu0 0.0
        %915 = vmatpush1.xpose.msra.mxu0 0.0
        %916 = vmatprep.subr.mxu0 0.0
        %917 = vmatpush1.xpose.msra.mxu0 0.0
        %918 = vmatprep.subr.mxu0 0.0
        %919 = vmatpush1.xpose.msra.mxu0 0.0
        %920 = vmatprep.mubr.f32.mxu0 0.0
        %921 = vmatmul.mubr.f32.gmra.mrb[0].mxu0 %v852
        %v922 = vpop.f32.mrb[0].mxu0
        %v923 = vadd.f32 0.0, %v922
        %v924 = vpop.f32.mrb[0].mxu0
        %925 = vdwg.mxu0
        %926 = vrot.lane.b32.xlu0 %v392, 96
        %v927 = vpop.permute.xlu0 %926
        %v928 = vsel %vm395, %v392, 0
        %v930 = vsel %vm395, %v927, 0
        %932 = vmatprep.subr.mxu0 0.0
        %933 = vmatpush1.xpose.msra.mxu0 %v930
        %934 = vmatprep.subr.mxu0 0.0
        %935 = vmatpush1.xpose.msra.mxu0 0.0
        %936 = vmatprep.subr.mxu0 0.0
        %937 = vmatpush1.xpose.msra.mxu0 0.0
        %938 = vmatprep.subr.mxu0 0.0
        %939 = vmatpush1.xpose.msra.mxu0 0.0
        %940 = vmatprep.subr.mxu0 0.0
        %941 = vmatpush1.xpose.msra.mxu0 0.0
        %942 = vmatprep.subr.mxu0 0.0
        %943 = vmatpush1.xpose.msra.mxu0 0.0
        %944 = vmatprep.subr.mxu0 0.0
        %945 = vmatpush1.xpose.msra.mxu0 0.0
        %946 = vmatprep.subr.mxu0 0.0
        %947 = vmatpush1.xpose.msra.mxu0 0.0
        %948 = vmatprep.subr.mxu0 0.0
        %949 = vmatpush1.xpose.msra.mxu0 0.0
        %950 = vmatprep.subr.mxu0 0.0
        %951 = vmatpush1.xpose.msra.mxu0 0.0
        %952 = vmatprep.subr.mxu0 0.0
        %953 = vmatpush1.xpose.msra.mxu0 0.0
        %954 = vmatprep.subr.mxu0 0.0
        %955 = vmatpush1.xpose.msra.mxu0 0.0
        %956 = vmatprep.subr.mxu0 0.0
        %957 = vmatpush1.xpose.msra.mxu0 0.0
        %958 = vmatprep.subr.mxu0 0.0
        %959 = vmatpush1.xpose.msra.mxu0 0.0
        %960 = vmatprep.subr.mxu0 0.0
        %961 = vmatpush1.xpose.msra.mxu0 0.0
        %962 = vmatprep.subr.mxu0 0.0
        %963 = vmatpush1.xpose.msra.mxu0 0.0
        %964 = vmatprep.subr.mxu0 0.0
        %965 = vmatpush1.xpose.msra.mxu0 0.0
        %966 = vmatprep.subr.mxu0 0.0
        %967 = vmatpush1.xpose.msra.mxu0 0.0
        %968 = vmatprep.subr.mxu0 0.0
        %969 = vmatpush1.xpose.msra.mxu0 0.0
        %970 = vmatprep.subr.mxu0 0.0
        %971 = vmatpush1.xpose.msra.mxu0 0.0
        %972 = vmatprep.subr.mxu0 0.0
        %973 = vmatpush1.xpose.msra.mxu0 0.0
        %974 = vmatprep.subr.mxu0 0.0
        %975 = vmatpush1.xpose.msra.mxu0 0.0
        %976 = vmatprep.subr.mxu0 0.0
        %977 = vmatpush1.xpose.msra.mxu0 0.0
        %978 = vmatprep.subr.mxu0 0.0
        %979 = vmatpush1.xpose.msra.mxu0 0.0
        %980 = vmatprep.subr.mxu0 0.0
        %981 = vmatpush1.xpose.msra.mxu0 0.0
        %982 = vmatprep.subr.mxu0 0.0
        %983 = vmatpush1.xpose.msra.mxu0 0.0
        %984 = vmatprep.subr.mxu0 0.0
        %985 = vmatpush1.xpose.msra.mxu0 0.0
        %986 = vmatprep.subr.mxu0 0.0
        %987 = vmatpush1.xpose.msra.mxu0 0.0
        %988 = vmatprep.subr.mxu0 0.0
        %989 = vmatpush1.xpose.msra.mxu0 0.0
        %990 = vmatprep.subr.mxu0 0.0
        %991 = vmatpush1.xpose.msra.mxu0 0.0
        %992 = vmatprep.subr.mxu0 0.0
        %993 = vmatpush1.xpose.msra.mxu0 0.0
        %994 = vmatprep.subr.mxu0 0.0
        %995 = vmatpush1.xpose.msra.mxu0 0.0
        %996 = vmatprep.mubr.f32.mxu0 0.0
        %997 = vmatmul.mubr.f32.gmra.mrb[0].mxu0 %v928
        %v998 = vpop.f32.mrb[0].mxu0
        %v999 = vadd.f32 0.0, %v998
        %v1000 = vpop.f32.mrb[0].mxu0
        %1001 = vdwg.mxu0
        %v1002 = vmul.f32 %v467, 0.35355338
        %v1003 = vmul.f32 %v543, 0.35355338
        %v1004 = vmul.f32 %v619, 0.35355338
        %v1005 = vmul.f32 %v695, 0.35355338
        %v1006 = vmul.f32 %v771, 0.35355338
        %v1007 = vmul.f32 %v847, 0.35355338
        %v1008 = vmul.f32 %v923, 0.35355338
        %v1009 = vmul.f32 %v999, 0.35355338
        %v1010 = vadd.f32 %v1002, %v276
        %v1011 = vadd.f32 %v1003, %v277
        %v1012 = vadd.f32 %v1004, %v278
        %v1013 = vadd.f32 %v1005, %v279
        %v1014 = vadd.f32 %v1006, %v280
        %v1015 = vadd.f32 %v1007, %v281
        %v1016 = vadd.f32 %v1008, %v282
        %v1017 = vadd.f32 %v1009, %v283
        %v1018 = vsel %vm395, %v1010, -inf
        %1019 = vmax.xlane.f32.xlu0 %v1018
        %v1020 = vpop.xlane.xlu0 %1019
        %v1021 = vsel %vm395, %v1011, -inf
        %1022 = vmax.xlane.f32.xlu0 %v1021
        %v1023 = vpop.xlane.xlu0 %1022
        %v1024 = vsel %vm395, %v1012, -inf
        %1025 = vmax.xlane.f32.xlu0 %v1024
        %v1026 = vpop.xlane.xlu0 %1025
        %v1027 = vsel %vm395, %v1013, -inf
        %1028 = vmax.xlane.f32.xlu0 %v1027
        %v1029 = vpop.xlane.xlu0 %1028
        %v1030 = vsel %vm395, %v1014, -inf
        %1031 = vmax.xlane.f32.xlu0 %v1030
        %v1032 = vpop.xlane.xlu0 %1031
        %v1033 = vsel %vm395, %v1015, -inf
        %1034 = vmax.xlane.f32.xlu0 %v1033
        %v1035 = vpop.xlane.xlu0 %1034
        %v1036 = vsel %vm395, %v1016, -inf
        %1037 = vmax.xlane.f32.xlu0 %v1036
        %v1038 = vpop.xlane.xlu0 %1037
        %v1039 = vsel %vm395, %v1017, -inf
        %1040 = vmax.xlane.f32.xlu0 %v1039
        %v1041 = vpop.xlane.xlu0 %1040
        %v1042 = vsub.f32 %v1010, %v1020
        %v1043 = vsub.f32 %v1011, %v1023
        %v1044 = vsub.f32 %v1012, %v1026
        %v1045 = vsub.f32 %v1013, %v1029
        %v1046 = vsub.f32 %v1014, %v1032
        %v1047 = vsub.f32 %v1015, %v1035
        %v1048 = vsub.f32 %v1016, %v1038
        %v1049 = vsub.f32 %v1017, %v1041
        %v1050 = vmul.f32 %v1042, 1.442695
        %v1051 = vpow.pop %v1050
        %v1052 = vmul.f32 %v1043, 1.442695
        %v1053 = vpow.pop %v1052
        %v1054 = vmul.f32 %v1044, 1.442695
        %v1055 = vpow.pop %v1054
        %v1056 = vmul.f32 %v1045, 1.442695
        %v1057 = vpow.pop %v1056
        %v1058 = vmul.f32 %v1046, 1.442695
        %v1059 = vpow.pop %v1058
        %v1060 = vmul.f32 %v1047, 1.442695
        %v1061 = vpow.pop %v1060
        %v1062 = vmul.f32 %v1048, 1.442695
        %v1063 = vpow.pop %v1062
        %v1064 = vmul.f32 %v1049, 1.442695
        %v1065 = vpow.pop %v1064
        %v1066 = vsel %vm395, %v1051, 0.0
        %1067 = vadd.xlane.f32.xlu0 %v1066
        %v1068 = vpop.xlane.xlu0 %1067
        %v1069 = vsel %vm395, %v1053, 0.0
        %1070 = vadd.xlane.f32.xlu0 %v1069
        %v1071 = vpop.xlane.xlu0 %1070
        %v1072 = vsel %vm395, %v1055, 0.0
        %1073 = vadd.xlane.f32.xlu0 %v1072
        %v1074 = vpop.xlane.xlu0 %1073
        %v1075 = vsel %vm395, %v1057, 0.0
        %1076 = vadd.xlane.f32.xlu0 %v1075
        %v1077 = vpop.xlane.xlu0 %1076
        %v1078 = vsel %vm395, %v1059, 0.0
        %1079 = vadd.xlane.f32.xlu0 %v1078
        %v1080 = vpop.xlane.xlu0 %1079
        %v1081 = vsel %vm395, %v1061, 0.0
        %1082 = vadd.xlane.f32.xlu0 %v1081
        %v1083 = vpop.xlane.xlu0 %1082
        %v1084 = vsel %vm395, %v1063, 0.0
        %1085 = vadd.xlane.f32.xlu0 %v1084
        %v1086 = vpop.xlane.xlu0 %1085
        %v1087 = vsel %vm395, %v1065, 0.0
        %1088 = vadd.xlane.f32.xlu0 %v1087
        %v1089 = vpop.xlane.xlu0 %1088
        %v1090 = vrcp.pop %v1068
        %v1091 = vrcp.pop %v1071
        %v1092 = vrcp.pop %v1074
        %v1093 = vrcp.pop %v1077
        %v1094 = vrcp.pop %v1080
        %v1095 = vrcp.pop %v1083
        %v1096 = vrcp.pop %v1086
        %v1097 = vrcp.pop %v1089
        %v1098 = vmul.f32 %v1051, %v1090
        %v1099 = vmul.f32 %v1053, %v1091
        %v1100 = vmul.f32 %v1055, %v1092
        %v1101 = vmul.f32 %v1057, %v1093
        %v1102 = vmul.f32 %v1059, %v1094
        %v1103 = vmul.f32 %v1061, %v1095
        %v1104 = vmul.f32 %v1063, %v1096
        %v1105 = vmul.f32 %v1065, %v1097
        %1106 = vrot.lane.b32.xlu0 %v371, 64
        %v1107 = vpop.permute.xlu0 %1106
        %v1110 = vsel %vm395, %v1098, 0
        %1112 = vmatprep.subr.mxu0 0.0
        %1113 = vmatpush1.msra.mxu0 %v1107
        %1114 = vmatprep.subr.mxu0 0.0
        %1115 = vmatpush1.msra.mxu0 0.0
        %1116 = vmatprep.subr.mxu0 0.0
        %1117 = vmatpush1.msra.mxu0 0.0
        %1118 = vmatprep.subr.mxu0 0.0
        %1119 = vmatpush1.msra.mxu0 0.0
        %1120 = vmatprep.subr.mxu0 0.0
        %1121 = vmatpush1.msra.mxu0 0.0
        %1122 = vmatprep.subr.mxu0 0.0
        %1123 = vmatpush1.msra.mxu0 0.0
        %1124 = vmatprep.subr.mxu0 0.0
        %1125 = vmatpush1.msra.mxu0 0.0
        %1126 = vmatprep.subr.mxu0 0.0
        %1127 = vmatpush1.msra.mxu0 0.0
        %1128 = vmatprep.subr.mxu0 0.0
        %1129 = vmatpush1.msra.mxu0 0.0
        %1130 = vmatprep.subr.mxu0 0.0
        %1131 = vmatpush1.msra.mxu0 0.0
        %1132 = vmatprep.subr.mxu0 0.0
        %1133 = vmatpush1.msra.mxu0 0.0
        %1134 = vmatprep.subr.mxu0 0.0
        %1135 = vmatpush1.msra.mxu0 0.0
        %1136 = vmatprep.subr.mxu0 0.0
        %1137 = vmatpush1.msra.mxu0 0.0
        %1138 = vmatprep.subr.mxu0 0.0
        %1139 = vmatpush1.msra.mxu0 0.0
        %1140 = vmatprep.subr.mxu0 0.0
        %1141 = vmatpush1.msra.mxu0 0.0
        %1142 = vmatprep.subr.mxu0 0.0
        %1143 = vmatpush1.msra.mxu0 0.0
        %1144 = vmatprep.subr.mxu0 0.0
        %1145 = vmatpush1.msra.mxu0 0.0
        %1146 = vmatprep.subr.mxu0 0.0
        %1147 = vmatpush1.msra.mxu0 0.0
        %1148 = vmatprep.subr.mxu0 0.0
        %1149 = vmatpush1.msra.mxu0 0.0
        %1150 = vmatprep.subr.mxu0 0.0
        %1151 = vmatpush1.msra.mxu0 0.0
        %1152 = vmatprep.subr.mxu0 0.0
        %1153 = vmatpush1.msra.mxu0 0.0
        %1154 = vmatprep.subr.mxu0 0.0
        %1155 = vmatpush1.msra.mxu0 0.0
        %1156 = vmatprep.subr.mxu0 0.0
        %1157 = vmatpush1.msra.mxu0 0.0
        %1158 = vmatprep.subr.mxu0 0.0
        %1159 = vmatpush1.msra.mxu0 0.0
        %1160 = vmatprep.subr.mxu0 0.0
        %1161 = vmatpush1.msra.mxu0 0.0
        %1162 = vmatprep.subr.mxu0 0.0
        %1163 = vmatpush1.msra.mxu0 0.0
        %1164 = vmatprep.subr.mxu0 0.0
        %1165 = vmatpush1.msra.mxu0 0.0
        %1166 = vmatprep.subr.mxu0 0.0
        %1167 = vmatpush1.msra.mxu0 0.0
        %1168 = vmatprep.subr.mxu0 0.0
        %1169 = vmatpush1.msra.mxu0 0.0
        %1170 = vmatprep.subr.mxu0 0.0
        %1171 = vmatpush1.msra.mxu0 0.0
        %1172 = vmatprep.subr.mxu0 0.0
        %1173 = vmatpush1.msra.mxu0 0.0
        %1174 = vmatprep.subr.mxu0 0.0
        %1175 = vmatpush1.msra.mxu0 0.0
        %1176 = vmatprep.mubr.f32.mxu0 0.0
        %1177 = vmatmul.mubr.f32.gmra.mrb[0].mxu0 %v1110
        %v1178 = vpop.f32.mrb[0].mxu0
        %v1179 = vadd.f32 0.0, %v1178
        %v1180 = vpop.f32.mrb[0].mxu0
        %1181 = vdwg.mxu0
        %1182 = vrot.lane.b32.xlu0 %v376, 64
        %v1183 = vpop.permute.xlu0 %1182
        %v1186 = vsel %vm395, %v1099, 0
        %1188 = vmatprep.subr.mxu0 0.0
        %1189 = vmatpush1.msra.mxu0 %v1183
        %1190 = vmatprep.subr.mxu0 0.0
        %1191 = vmatpush1.msra.mxu0 0.0
        %1192 = vmatprep.subr.mxu0 0.0
        %1193 = vmatpush1.msra.mxu0 0.0
        %1194 = vmatprep.subr.mxu0 0.0
        %1195 = vmatpush1.msra.mxu0 0.0
        %1196 = vmatprep.subr.mxu0 0.0
        %1197 = vmatpush1.msra.mxu0 0.0
        %1198 = vmatprep.subr.mxu0 0.0
        %1199 = vmatpush1.msra.mxu0 0.0
        %1200 = vmatprep.subr.mxu0 0.0
        %1201 = vmatpush1.msra.mxu0 0.0
        %1202 = vmatprep.subr.mxu0 0.0
        %1203 = vmatpush1.msra.mxu0 0.0
        %1204 = vmatprep.subr.mxu0 0.0
        %1205 = vmatpush1.msra.mxu0 0.0
        %1206 = vmatprep.subr.mxu0 0.0
        %1207 = vmatpush1.msra.mxu0 0.0
        %1208 = vmatprep.subr.mxu0 0.0
        %1209 = vmatpush1.msra.mxu0 0.0
        %1210 = vmatprep.subr.mxu0 0.0
        %1211 = vmatpush1.msra.mxu0 0.0
        %1212 = vmatprep.subr.mxu0 0.0
        %1213 = vmatpush1.msra.mxu0 0.0
        %1214 = vmatprep.subr.mxu0 0.0
        %1215 = vmatpush1.msra.mxu0 0.0
        %1216 = vmatprep.subr.mxu0 0.0
        %1217 = vmatpush1.msra.mxu0 0.0
        %1218 = vmatprep.subr.mxu0 0.0
        %1219 = vmatpush1.msra.mxu0 0.0
        %1220 = vmatprep.subr.mxu0 0.0
        %1221 = vmatpush1.msra.mxu0 0.0
        %1222 = vmatprep.subr.mxu0 0.0
        %1223 = vmatpush1.msra.mxu0 0.0
        %1224 = vmatprep.subr.mxu0 0.0
        %1225 = vmatpush1.msra.mxu0 0.0
        %1226 = vmatprep.subr.mxu0 0.0
        %1227 = vmatpush1.msra.mxu0 0.0
        %1228 = vmatprep.subr.mxu0 0.0
        %1229 = vmatpush1.msra.mxu0 0.0
        %1230 = vmatprep.subr.mxu0 0.0
        %1231 = vmatpush1.msra.mxu0 0.0
        %1232 = vmatprep.subr.mxu0 0.0
        %1233 = vmatpush1.msra.mxu0 0.0
        %1234 = vmatprep.subr.mxu0 0.0
        %1235 = vmatpush1.msra.mxu0 0.0
        %1236 = vmatprep.subr.mxu0 0.0
        %1237 = vmatpush1.msra.mxu0 0.0
        %1238 = vmatprep.subr.mxu0 0.0
        %1239 = vmatpush1.msra.mxu0 0.0
        %1240 = vmatprep.subr.mxu0 0.0
        %1241 = vmatpush1.msra.mxu0 0.0
        %1242 = vmatprep.subr.mxu0 0.0
        %1243 = vmatpush1.msra.mxu0 0.0
        %1244 = vmatprep.subr.mxu0 0.0
        %1245 = vmatpush1.msra.mxu0 0.0
        %1246 = vmatprep.subr.mxu0 0.0
        %1247 = vmatpush1.msra.mxu0 0.0
        %1248 = vmatprep.subr.mxu0 0.0
        %1249 = vmatpush1.msra.mxu0 0.0
        %1250 = vmatprep.subr.mxu0 0.0
        %1251 = vmatpush1.msra.mxu0 0.0
        %1252 = vmatprep.mubr.f32.mxu0 0.0
        %1253 = vmatmul.mubr.f32.gmra.mrb[0].mxu0 %v1186
        %v1254 = vpop.f32.mrb[0].mxu0
        %v1255 = vadd.f32 0.0, %v1254
        %v1256 = vpop.f32.mrb[0].mxu0
        %1257 = vdwg.mxu0
        %1258 = vrot.lane.b32.xlu0 %v382, 64
        %v1259 = vpop.permute.xlu0 %1258
        %v1262 = vsel %vm395, %v1100, 0
        %1264 = vmatprep.subr.mxu0 0.0
        %1265 = vmatpush1.msra.mxu0 %v1259
        %1266 = vmatprep.subr.mxu0 0.0
        %1267 = vmatpush1.msra.mxu0 0.0
        %1268 = vmatprep.subr.mxu0 0.0
        %1269 = vmatpush1.msra.mxu0 0.0
        %1270 = vmatprep.subr.mxu0 0.0
        %1271 = vmatpush1.msra.mxu0 0.0
        %1272 = vmatprep.subr.mxu0 0.0
        %1273 = vmatpush1.msra.mxu0 0.0
        %1274 = vmatprep.subr.mxu0 0.0
        %1275 = vmatpush1.msra.mxu0 0.0
        %1276 = vmatprep.subr.mxu0 0.0
        %1277 = vmatpush1.msra.mxu0 0.0
        %1278 = vmatprep.subr.mxu0 0.0
        %1279 = vmatpush1.msra.mxu0 0.0
        %1280 = vmatprep.subr.mxu0 0.0
        %1281 = vmatpush1.msra.mxu0 0.0
        %1282 = vmatprep.subr.mxu0 0.0
        %1283 = vmatpush1.msra.mxu0 0.0
        %1284 = vmatprep.subr.mxu0 0.0
        %1285 = vmatpush1.msra.mxu0 0.0
        %1286 = vmatprep.subr.mxu0 0.0
        %1287 = vmatpush1.msra.mxu0 0.0
        %1288 = vmatprep.subr.mxu0 0.0
        %1289 = vmatpush1.msra.mxu0 0.0
        %1290 = vmatprep.subr.mxu0 0.0
        %1291 = vmatpush1.msra.mxu0 0.0
        %1292 = vmatprep.subr.mxu0 0.0
        %1293 = vmatpush1.msra.mxu0 0.0
        %1294 = vmatprep.subr.mxu0 0.0
        %1295 = vmatpush1.msra.mxu0 0.0
        %1296 = vmatprep.subr.mxu0 0.0
        %1297 = vmatpush1.msra.mxu0 0.0
        %1298 = vmatprep.subr.mxu0 0.0
        %1299 = vmatpush1.msra.mxu0 0.0
        %1300 = vmatprep.subr.mxu0 0.0
        %1301 = vmatpush1.msra.mxu0 0.0
        %1302 = vmatprep.subr.mxu0 0.0
        %1303 = vmatpush1.msra.mxu0 0.0
        %1304 = vmatprep.subr.mxu0 0.0
        %1305 = vmatpush1.msra.mxu0 0.0
        %1306 = vmatprep.subr.mxu0 0.0
        %1307 = vmatpush1.msra.mxu0 0.0
        %1308 = vmatprep.subr.mxu0 0.0
        %1309 = vmatpush1.msra.mxu0 0.0
        %1310 = vmatprep.subr.mxu0 0.0
        %1311 = vmatpush1.msra.mxu0 0.0
        %1312 = vmatprep.subr.mxu0 0.0
        %1313 = vmatpush1.msra.mxu0 0.0
        %1314 = vmatprep.subr.mxu0 0.0
        %1315 = vmatpush1.msra.mxu0 0.0
        %1316 = vmatprep.subr.mxu0 0.0
        %1317 = vmatpush1.msra.mxu0 0.0
        %1318 = vmatprep.subr.mxu0 0.0
        %1319 = vmatpush1.msra.mxu0 0.0
        %1320 = vmatprep.subr.mxu0 0.0
        %1321 = vmatpush1.msra.mxu0 0.0
        %1322 = vmatprep.subr.mxu0 0.0
        %1323 = vmatpush1.msra.mxu0 0.0
        %1324 = vmatprep.subr.mxu0 0.0
        %1325 = vmatpush1.msra.mxu0 0.0
        %1326 = vmatprep.subr.mxu0 0.0
        %1327 = vmatpush1.msra.mxu0 0.0
        %1328 = vmatprep.mubr.f32.mxu0 0.0
        %1329 = vmatmul.mubr.f32.gmra.mrb[0].mxu0 %v1262
        %v1330 = vpop.f32.mrb[0].mxu0
        %v1331 = vadd.f32 0.0, %v1330
        %v1332 = vpop.f32.mrb[0].mxu0
        %1333 = vdwg.mxu0
        %1334 = vrot.lane.b32.xlu0 %v384, 64
        %v1335 = vpop.permute.xlu0 %1334
        %v1338 = vsel %vm395, %v1101, 0
        %1340 = vmatprep.subr.mxu0 0.0
        %1341 = vmatpush1.msra.mxu0 %v1335
        %1342 = vmatprep.subr.mxu0 0.0
        %1343 = vmatpush1.msra.mxu0 0.0
        %1344 = vmatprep.subr.mxu0 0.0
        %1345 = vmatpush1.msra.mxu0 0.0
        %1346 = vmatprep.subr.mxu0 0.0
        %1347 = vmatpush1.msra.mxu0 0.0
        %1348 = vmatprep.subr.mxu0 0.0
        %1349 = vmatpush1.msra.mxu0 0.0
        %1350 = vmatprep.subr.mxu0 0.0
        %1351 = vmatpush1.msra.mxu0 0.0
        %1352 = vmatprep.subr.mxu0 0.0
        %1353 = vmatpush1.msra.mxu0 0.0
        %1354 = vmatprep.subr.mxu0 0.0
        %1355 = vmatpush1.msra.mxu0 0.0
        %1356 = vmatprep.subr.mxu0 0.0
        %1357 = vmatpush1.msra.mxu0 0.0
        %1358 = vmatprep.subr.mxu0 0.0
        %1359 = vmatpush1.msra.mxu0 0.0
        %1360 = vmatprep.subr.mxu0 0.0
        %1361 = vmatpush1.msra.mxu0 0.0
        %1362 = vmatprep.subr.mxu0 0.0
        %1363 = vmatpush1.msra.mxu0 0.0
        %1364 = vmatprep.subr.mxu0 0.0
        %1365 = vmatpush1.msra.mxu0 0.0
        %1366 = vmatprep.subr.mxu0 0.0
        %1367 = vmatpush1.msra.mxu0 0.0
        %1368 = vmatprep.subr.mxu0 0.0
        %1369 = vmatpush1.msra.mxu0 0.0
        %1370 = vmatprep.subr.mxu0 0.0
        %1371 = vmatpush1.msra.mxu0 0.0
        %1372 = vmatprep.subr.mxu0 0.0
        %1373 = vmatpush1.msra.mxu0 0.0
        %1374 = vmatprep.subr.mxu0 0.0
        %1375 = vmatpush1.msra.mxu0 0.0
        %1376 = vmatprep.subr.mxu0 0.0
        %1377 = vmatpush1.msra.mxu0 0.0
        %1378 = vmatprep.subr.mxu0 0.0
        %1379 = vmatpush1.msra.mxu0 0.0
        %1380 = vmatprep.subr.mxu0 0.0
        %1381 = vmatpush1.msra.mxu0 0.0
        %1382 = vmatprep.subr.mxu0 0.0
        %1383 = vmatpush1.msra.mxu0 0.0
        %1384 = vmatprep.subr.mxu0 0.0
        %1385 = vmatpush1.msra.mxu0 0.0
        %1386 = vmatprep.subr.mxu0 0.0
        %1387 = vmatpush1.msra.mxu0 0.0
        %1388 = vmatprep.subr.mxu0 0.0
        %1389 = vmatpush1.msra.mxu0 0.0
        %1390 = vmatprep.subr.mxu0 0.0
        %1391 = vmatpush1.msra.mxu0 0.0
        %1392 = vmatprep.subr.mxu0 0.0
        %1393 = vmatpush1.msra.mxu0 0.0
        %1394 = vmatprep.subr.mxu0 0.0
        %1395 = vmatpush1.msra.mxu0 0.0
        %1396 = vmatprep.subr.mxu0 0.0
        %1397 = vmatpush1.msra.mxu0 0.0
        %1398 = vmatprep.subr.mxu0 0.0
        %1399 = vmatpush1.msra.mxu0 0.0
        %1400 = vmatprep.subr.mxu0 0.0
        %1401 = vmatpush1.msra.mxu0 0.0
        %1402 = vmatprep.subr.mxu0 0.0
        %1403 = vmatpush1.msra.mxu0 0.0
        %1404 = vmatprep.mubr.f32.mxu0 0.0
        %1405 = vmatmul.mubr.f32.gmra.mrb[0].mxu0 %v1338
        %v1406 = vpop.f32.mrb[0].mxu0
        %v1407 = vadd.f32 0.0, %v1406
        %v1408 = vpop.f32.mrb[0].mxu0
        %1409 = vdwg.mxu0
        %1410 = vrot.lane.b32.xlu0 %v386, 64
        %v1411 = vpop.permute.xlu0 %1410
        %v1414 = vsel %vm395, %v1102, 0
        %1416 = vmatprep.subr.mxu0 0.0
        %1417 = vmatpush1.msra.mxu0 %v1411
        %1418 = vmatprep.subr.mxu0 0.0
        %1419 = vmatpush1.msra.mxu0 0.0
        %1420 = vmatprep.subr.mxu0 0.0
        %1421 = vmatpush1.msra.mxu0 0.0
        %1422 = vmatprep.subr.mxu0 0.0
        %1423 = vmatpush1.msra.mxu0 0.0
        %1424 = vmatprep.subr.mxu0 0.0
        %1425 = vmatpush1.msra.mxu0 0.0
        %1426 = vmatprep.subr.mxu0 0.0
        %1427 = vmatpush1.msra.mxu0 0.0
        %1428 = vmatprep.subr.mxu0 0.0
        %1429 = vmatpush1.msra.mxu0 0.0
        %1430 = vmatprep.subr.mxu0 0.0
        %1431 = vmatpush1.msra.mxu0 0.0
        %1432 = vmatprep.subr.mxu0 0.0
        %1433 = vmatpush1.msra.mxu0 0.0
        %1434 = vmatprep.subr.mxu0 0.0
        %1435 = vmatpush1.msra.mxu0 0.0
        %1436 = vmatprep.subr.mxu0 0.0
        %1437 = vmatpush1.msra.mxu0 0.0
        %1438 = vmatprep.subr.mxu0 0.0
        %1439 = vmatpush1.msra.mxu0 0.0
        %1440 = vmatprep.subr.mxu0 0.0
        %1441 = vmatpush1.msra.mxu0 0.0
        %1442 = vmatprep.subr.mxu0 0.0
        %1443 = vmatpush1.msra.mxu0 0.0
        %1444 = vmatprep.subr.mxu0 0.0
        %1445 = vmatpush1.msra.mxu0 0.0
        %1446 = vmatprep.subr.mxu0 0.0
        %1447 = vmatpush1.msra.mxu0 0.0
        %1448 = vmatprep.subr.mxu0 0.0
        %1449 = vmatpush1.msra.mxu0 0.0
        %1450 = vmatprep.subr.mxu0 0.0
        %1451 = vmatpush1.msra.mxu0 0.0
        %1452 = vmatprep.subr.mxu0 0.0
        %1453 = vmatpush1.msra.mxu0 0.0
        %1454 = vmatprep.subr.mxu0 0.0
        %1455 = vmatpush1.msra.mxu0 0.0
        %1456 = vmatprep.subr.mxu0 0.0
        %1457 = vmatpush1.msra.mxu0 0.0
        %1458 = vmatprep.subr.mxu0 0.0
        %1459 = vmatpush1.msra.mxu0 0.0
        %1460 = vmatprep.subr.mxu0 0.0
        %1461 = vmatpush1.msra.mxu0 0.0
        %1462 = vmatprep.subr.mxu0 0.0
        %1463 = vmatpush1.msra.mxu0 0.0
        %1464 = vmatprep.subr.mxu0 0.0
        %1465 = vmatpush1.msra.mxu0 0.0
        %1466 = vmatprep.subr.mxu0 0.0
        %1467 = vmatpush1.msra.mxu0 0.0
        %1468 = vmatprep.subr.mxu0 0.0
        %1469 = vmatpush1.msra.mxu0 0.0
        %1470 = vmatprep.subr.mxu0 0.0
        %1471 = vmatpush1.msra.mxu0 0.0
        %1472 = vmatprep.subr.mxu0 0.0
        %1473 = vmatpush1.msra.mxu0 0.0
        %1474 = vmatprep.subr.mxu0 0.0
        %1475 = vmatpush1.msra.mxu0 0.0
        %1476 = vmatprep.subr.mxu0 0.0
        %1477 = vmatpush1.msra.mxu0 0.0
        %1478 = vmatprep.subr.mxu0 0.0
        %1479 = vmatpush1.msra.mxu0 0.0
        %1480 = vmatprep.mubr.f32.mxu0 0.0
        %1481 = vmatmul.mubr.f32.gmra.mrb[0].mxu0 %v1414
        %v1482 = vpop.f32.mrb[0].mxu0
        %v1483 = vadd.f32 0.0, %v1482
        %v1484 = vpop.f32.mrb[0].mxu0
        %1485 = vdwg.mxu0
        %1486 = vrot.lane.b32.xlu0 %v388, 64
        %v1487 = vpop.permute.xlu0 %1486
        %v1490 = vsel %vm395, %v1103, 0
        %1492 = vmatprep.subr.mxu0 0.0
        %1493 = vmatpush1.msra.mxu0 %v1487
        %1494 = vmatprep.subr.mxu0 0.0
        %1495 = vmatpush1.msra.mxu0 0.0
        %1496 = vmatprep.subr.mxu0 0.0
        %1497 = vmatpush1.msra.mxu0 0.0
        %1498 = vmatprep.subr.mxu0 0.0
        %1499 = vmatpush1.msra.mxu0 0.0
        %1500 = vmatprep.subr.mxu0 0.0
        %1501 = vmatpush1.msra.mxu0 0.0
        %1502 = vmatprep.subr.mxu0 0.0
        %1503 = vmatpush1.msra.mxu0 0.0
        %1504 = vmatprep.subr.mxu0 0.0
        %1505 = vmatpush1.msra.mxu0 0.0
        %1506 = vmatprep.subr.mxu0 0.0
        %1507 = vmatpush1.msra.mxu0 0.0
        %1508 = vmatprep.subr.mxu0 0.0
        %1509 = vmatpush1.msra.mxu0 0.0
        %1510 = vmatprep.subr.mxu0 0.0
        %1511 = vmatpush1.msra.mxu0 0.0
        %1512 = vmatprep.subr.mxu0 0.0
        %1513 = vmatpush1.msra.mxu0 0.0
        %1514 = vmatprep.subr.mxu0 0.0
        %1515 = vmatpush1.msra.mxu0 0.0
        %1516 = vmatprep.subr.mxu0 0.0
        %1517 = vmatpush1.msra.mxu0 0.0
        %1518 = vmatprep.subr.mxu0 0.0
        %1519 = vmatpush1.msra.mxu0 0.0
        %1520 = vmatprep.subr.mxu0 0.0
        %1521 = vmatpush1.msra.mxu0 0.0
        %1522 = vmatprep.subr.mxu0 0.0
        %1523 = vmatpush1.msra.mxu0 0.0
        %1524 = vmatprep.subr.mxu0 0.0
        %1525 = vmatpush1.msra.mxu0 0.0
        %1526 = vmatprep.subr.mxu0 0.0
        %1527 = vmatpush1.msra.mxu0 0.0
        %1528 = vmatprep.subr.mxu0 0.0
        %1529 = vmatpush1.msra.mxu0 0.0
        %1530 = vmatprep.subr.mxu0 0.0
        %1531 = vmatpush1.msra.mxu0 0.0
        %1532 = vmatprep.subr.mxu0 0.0
        %1533 = vmatpush1.msra.mxu0 0.0
        %1534 = vmatprep.subr.mxu0 0.0
        %1535 = vmatpush1.msra.mxu0 0.0
        %1536 = vmatprep.subr.mxu0 0.0
        %1537 = vmatpush1.msra.mxu0 0.0
        %1538 = vmatprep.subr.mxu0 0.0
        %1539 = vmatpush1.msra.mxu0 0.0
        %1540 = vmatprep.subr.mxu0 0.0
        %1541 = vmatpush1.msra.mxu0 0.0
        %1542 = vmatprep.subr.mxu0 0.0
        %1543 = vmatpush1.msra.mxu0 0.0
        %1544 = vmatprep.subr.mxu0 0.0
        %1545 = vmatpush1.msra.mxu0 0.0
        %1546 = vmatprep.subr.mxu0 0.0
        %1547 = vmatpush1.msra.mxu0 0.0
        %1548 = vmatprep.subr.mxu0 0.0
        %1549 = vmatpush1.msra.mxu0 0.0
        %1550 = vmatprep.subr.mxu0 0.0
        %1551 = vmatpush1.msra.mxu0 0.0
        %1552 = vmatprep.subr.mxu0 0.0
        %1553 = vmatpush1.msra.mxu0 0.0
        %1554 = vmatprep.subr.mxu0 0.0
        %1555 = vmatpush1.msra.mxu0 0.0
        %1556 = vmatprep.mubr.f32.mxu0 0.0
        %1557 = vmatmul.mubr.f32.gmra.mrb[0].mxu0 %v1490
        %v1558 = vpop.f32.mrb[0].mxu0
        %v1559 = vadd.f32 0.0, %v1558
        %v1560 = vpop.f32.mrb[0].mxu0
        %1561 = vdwg.mxu0
        %1562 = vrot.lane.b32.xlu0 %v390, 64
        %v1563 = vpop.permute.xlu0 %1562
        %v1566 = vsel %vm395, %v1104, 0
        %1568 = vmatprep.subr.mxu0 0.0
        %1569 = vmatpush1.msra.mxu0 %v1563
        %1570 = vmatprep.subr.mxu0 0.0
        %1571 = vmatpush1.msra.mxu0 0.0
        %1572 = vmatprep.subr.mxu0 0.0
        %1573 = vmatpush1.msra.mxu0 0.0
        %1574 = vmatprep.subr.mxu0 0.0
        %1575 = vmatpush1.msra.mxu0 0.0
        %1576 = vmatprep.subr.mxu0 0.0
        %1577 = vmatpush1.msra.mxu0 0.0
        %1578 = vmatprep.subr.mxu0 0.0
        %1579 = vmatpush1.msra.mxu0 0.0
        %1580 = vmatprep.subr.mxu0 0.0
        %1581 = vmatpush1.msra.mxu0 0.0
        %1582 = vmatprep.subr.mxu0 0.0
        %1583 = vmatpush1.msra.mxu0 0.0
        %1584 = vmatprep.subr.mxu0 0.0
        %1585 = vmatpush1.msra.mxu0 0.0
        %1586 = vmatprep.subr.mxu0 0.0
        %1587 = vmatpush1.msra.mxu0 0.0
        %1588 = vmatprep.subr.mxu0 0.0
        %1589 = vmatpush1.msra.mxu0 0.0
        %1590 = vmatprep.subr.mxu0 0.0
        %1591 = vmatpush1.msra.mxu0 0.0
        %1592 = vmatprep.subr.mxu0 0.0
        %1593 = vmatpush1.msra.mxu0 0.0
        %1594 = vmatprep.subr.mxu0 0.0
        %1595 = vmatpush1.msra.mxu0 0.0
        %1596 = vmatprep.subr.mxu0 0.0
        %1597 = vmatpush1.msra.mxu0 0.0
        %1598 = vmatprep.subr.mxu0 0.0
        %1599 = vmatpush1.msra.mxu0 0.0
        %1600 = vmatprep.subr.mxu0 0.0
        %1601 = vmatpush1.msra.mxu0 0.0
        %1602 = vmatprep.subr.mxu0 0.0
        %1603 = vmatpush1.msra.mxu0 0.0
        %1604 = vmatprep.subr.mxu0 0.0
        %1605 = vmatpush1.msra.mxu0 0.0
        %1606 = vmatprep.subr.mxu0 0.0
        %1607 = vmatpush1.msra.mxu0 0.0
        %1608 = vmatprep.subr.mxu0 0.0
        %1609 = vmatpush1.msra.mxu0 0.0
        %1610 = vmatprep.subr.mxu0 0.0
        %1611 = vmatpush1.msra.mxu0 0.0
        %1612 = vmatprep.subr.mxu0 0.0
        %1613 = vmatpush1.msra.mxu0 0.0
        %1614 = vmatprep.subr.mxu0 0.0
        %1615 = vmatpush1.msra.mxu0 0.0
        %1616 = vmatprep.subr.mxu0 0.0
        %1617 = vmatpush1.msra.mxu0 0.0
        %1618 = vmatprep.subr.mxu0 0.0
        %1619 = vmatpush1.msra.mxu0 0.0
        %1620 = vmatprep.subr.mxu0 0.0
        %1621 = vmatpush1.msra.mxu0 0.0
        %1622 = vmatprep.subr.mxu0 0.0
        %1623 = vmatpush1.msra.mxu0 0.0
        %1624 = vmatprep.subr.mxu0 0.0
        %1625 = vmatpush1.msra.mxu0 0.0
        %1626 = vmatprep.subr.mxu0 0.0
        %1627 = vmatpush1.msra.mxu0 0.0
        %1628 = vmatprep.subr.mxu0 0.0
        %1629 = vmatpush1.msra.mxu0 0.0
        %1630 = vmatprep.subr.mxu0 0.0
        %1631 = vmatpush1.msra.mxu0 0.0
        %1632 = vmatprep.mubr.f32.mxu0 0.0
        %1633 = vmatmul.mubr.f32.gmra.mrb[0].mxu0 %v1566
        %v1634 = vpop.f32.mrb[0].mxu0
        %v1635 = vadd.f32 0.0, %v1634
        %v1636 = vpop.f32.mrb[0].mxu0
        %1637 = vdwg.mxu0
        %1638 = vrot.lane.b32.xlu0 %v392, 64
        %v1639 = vpop.permute.xlu0 %1638
        %v1642 = vsel %vm395, %v1105, 0
        %1644 = vmatprep.subr.mxu0 0.0
        %1645 = vmatpush1.msra.mxu0 %v1639
        %1646 = vmatprep.subr.mxu0 0.0
        %1647 = vmatpush1.msra.mxu0 0.0
        %1648 = vmatprep.subr.mxu0 0.0
        %1649 = vmatpush1.msra.mxu0 0.0
        %1650 = vmatprep.subr.mxu0 0.0
        %1651 = vmatpush1.msra.mxu0 0.0
        %1652 = vmatprep.subr.mxu0 0.0
        %1653 = vmatpush1.msra.mxu0 0.0
        %1654 = vmatprep.subr.mxu0 0.0
        %1655 = vmatpush1.msra.mxu0 0.0
        %1656 = vmatprep.subr.mxu0 0.0
        %1657 = vmatpush1.msra.mxu0 0.0
        %1658 = vmatprep.subr.mxu0 0.0
        %1659 = vmatpush1.msra.mxu0 0.0
        %1660 = vmatprep.subr.mxu0 0.0
        %1661 = vmatpush1.msra.mxu0 0.0
        %1662 = vmatprep.subr.mxu0 0.0
        %1663 = vmatpush1.msra.mxu0 0.0
        %1664 = vmatprep.subr.mxu0 0.0
        %1665 = vmatpush1.msra.mxu0 0.0
        %1666 = vmatprep.subr.mxu0 0.0
        %1667 = vmatpush1.msra.mxu0 0.0
        %1668 = vmatprep.subr.mxu0 0.0
        %1669 = vmatpush1.msra.mxu0 0.0
        %1670 = vmatprep.subr.mxu0 0.0
        %1671 = vmatpush1.msra.mxu0 0.0
        %1672 = vmatprep.subr.mxu0 0.0
        %1673 = vmatpush1.msra.mxu0 0.0
        %1674 = vmatprep.subr.mxu0 0.0
        %1675 = vmatpush1.msra.mxu0 0.0
        %1676 = vmatprep.subr.mxu0 0.0
        %1677 = vmatpush1.msra.mxu0 0.0
        %1678 = vmatprep.subr.mxu0 0.0
        %1679 = vmatpush1.msra.mxu0 0.0
        %1680 = vmatprep.subr.mxu0 0.0
        %1681 = vmatpush1.msra.mxu0 0.0
        %1682 = vmatprep.subr.mxu0 0.0
        %1683 = vmatpush1.msra.mxu0 0.0
        %1684 = vmatprep.subr.mxu0 0.0
        %1685 = vmatpush1.msra.mxu0 0.0
        %1686 = vmatprep.subr.mxu0 0.0
        %1687 = vmatpush1.msra.mxu0 0.0
        %1688 = vmatprep.subr.mxu0 0.0
        %1689 = vmatpush1.msra.mxu0 0.0
        %1690 = vmatprep.subr.mxu0 0.0
        %1691 = vmatpush1.msra.mxu0 0.0
        %1692 = vmatprep.subr.mxu0 0.0
        %1693 = vmatpush1.msra.mxu0 0.0
        %1694 = vmatprep.subr.mxu0 0.0
        %1695 = vmatpush1.msra.mxu0 0.0
        %1696 = vmatprep.subr.mxu0 0.0
        %1697 = vmatpush1.msra.mxu0 0.0
        %1698 = vmatprep.subr.mxu0 0.0
        %1699 = vmatpush1.msra.mxu0 0.0
        %1700 = vmatprep.subr.mxu0 0.0
        %1701 = vmatpush1.msra.mxu0 0.0
        %1702 = vmatprep.subr.mxu0 0.0
        %1703 = vmatpush1.msra.mxu0 0.0
        %1704 = vmatprep.subr.mxu0 0.0
        %1705 = vmatpush1.msra.mxu0 0.0
        %1706 = vmatprep.subr.mxu0 0.0
        %1707 = vmatpush1.msra.mxu0 0.0
        %1708 = vmatprep.mubr.f32.mxu0 0.0
        %1709 = vmatmul.mubr.f32.gmra.mrb[0].mxu0 %v1642
        %v1710 = vpop.f32.mrb[0].mxu0
        %v1711 = vadd.f32 0.0, %v1710
        %v1712 = vpop.f32.mrb[0].mxu0
        %1713 = vdwg.mxu0
        %1716 = vrot.lane.b32.xlu0 %v1331, 8
        %v1717 = vpop.permute.xlu0 %1716
        %1718 = vrot.lane.b32.xlu0 %v1407, 8
        %v1719 = vpop.permute.xlu0 %1718
        %1724 = vrot.lane.b32.xlu0 %v1483, 16
        %v1725 = vpop.permute.xlu0 %1724
        %1726 = vrot.lane.b32.xlu0 %v1559, 16
        %v1727 = vpop.permute.xlu0 %1726
        %1732 = vrot.lane.b32.xlu0 %v1635, 24
        %v1733 = vpop.permute.xlu0 %1732
        %1734 = vrot.lane.b32.xlu0 %v1711, 24
        %v1735 = vpop.permute.xlu0 %1734
        %v1738 = vsel %vm395, %v1179, %v1717
        %v1739 = vsel %vm395, %v1255, %v1719
        %vm1740 = vcmask 130048
        %v1741 = vsel %vm1740, %v1738, %v1725
        %v1742 = vsel %vm1740, %v1739, %v1727
        %vm1743 = vcmask 195584
        %v1744 = vsel %vm1743, %v1741, %v1733
        %v1745 = vsel %vm1743, %v1742, %v1735
        %v1746 = vlaneseq
        %v1747 = vshrl.u32 %v1746, 7
        %v1748 = vsub.s32 1, %v1747
        %v1749 = vrot.slane %v292, %v1748
        %1754 = vrot.lane.b32.xlu0 %v284, 32
        %v1755 = vpop.permute.xlu0 %1754
        %1756 = vrot.lane.b32.xlu0 %v286, 32
        %v1757 = vpop.permute.xlu0 %1756
        %1758 = vrot.lane.b32.xlu0 %v288, 32
        %v1759 = vpop.permute.xlu0 %1758
        %1760 = vrot.lane.b32.xlu0 %v290, 32
        %v1761 = vpop.permute.xlu0 %1760
        %v1767 = vsel %vm297, %v1744, 0
        %v1770 = vsel %vm297, %v1745, 0
        %1772 = vmatprep.subr.mxu0 0.0
        %1773 = vmatpush1.msra.mxu0 %v1755
        %1774 = vmatprep.subr.mxu0 0.0
        %1775 = vmatpush1.msra.mxu0 %v1757
        %1776 = vmatprep.subr.mxu0 0.0
        %1777 = vmatpush1.msra.mxu0 %v1759
        %1778 = vmatprep.subr.mxu0 0.0
        %1779 = vmatpush1.msra.mxu0 %v1761
        %1780 = vmatprep.subr.mxu0 0.0
        %1781 = vmatpush1.msra.mxu0 0.0
        %1782 = vmatprep.subr.mxu0 0.0
        %1783 = vmatpush1.msra.mxu0 0.0
        %1784 = vmatprep.subr.mxu0 0.0
        %1785 = vmatpush1.msra.mxu0 0.0
        %1786 = vmatprep.subr.mxu0 0.0
        %1787 = vmatpush1.msra.mxu0 0.0
        %1788 = vmatprep.subr.mxu0 0.0
        %1789 = vmatpush1.msra.mxu0 0.0
        %1790 = vmatprep.subr.mxu0 0.0
        %1791 = vmatpush1.msra.mxu0 0.0
        %1792 = vmatprep.subr.mxu0 0.0
        %1793 = vmatpush1.msra.mxu0 0.0
        %1794 = vmatprep.subr.mxu0 0.0
        %1795 = vmatpush1.msra.mxu0 0.0
        %1796 = vmatprep.subr.mxu0 0.0
        %1797 = vmatpush1.msra.mxu0 0.0
        %1798 = vmatprep.subr.mxu0 0.0
        %1799 = vmatpush1.msra.mxu0 0.0
        %1800 = vmatprep.subr.mxu0 0.0
        %1801 = vmatpush1.msra.mxu0 0.0
        %1802 = vmatprep.subr.mxu0 0.0
        %1803 = vmatpush1.msra.mxu0 0.0
        %1804 = vmatprep.subr.mxu0 0.0
        %1805 = vmatpush1.msra.mxu0 0.0
        %1806 = vmatprep.subr.mxu0 0.0
        %1807 = vmatpush1.msra.mxu0 0.0
        %1808 = vmatprep.subr.mxu0 0.0
        %1809 = vmatpush1.msra.mxu0 0.0
        %1810 = vmatprep.subr.mxu0 0.0
        %1811 = vmatpush1.msra.mxu0 0.0
        %1812 = vmatprep.subr.mxu0 0.0
        %1813 = vmatpush1.msra.mxu0 0.0
        %1814 = vmatprep.subr.mxu0 0.0
        %1815 = vmatpush1.msra.mxu0 0.0
        %1816 = vmatprep.subr.mxu0 0.0
        %1817 = vmatpush1.msra.mxu0 0.0
        %1818 = vmatprep.subr.mxu0 0.0
        %1819 = vmatpush1.msra.mxu0 0.0
        %1820 = vmatprep.subr.mxu0 0.0
        %1821 = vmatpush1.msra.mxu0 0.0
        %1822 = vmatprep.subr.mxu0 0.0
        %1823 = vmatpush1.msra.mxu0 0.0
        %1824 = vmatprep.subr.mxu0 0.0
        %1825 = vmatpush1.msra.mxu0 0.0
        %1826 = vmatprep.subr.mxu0 0.0
        %1827 = vmatpush1.msra.mxu0 0.0
        %1828 = vmatprep.subr.mxu0 0.0
        %1829 = vmatpush1.msra.mxu0 0.0
        %1830 = vmatprep.subr.mxu0 0.0
        %1831 = vmatpush1.msra.mxu0 0.0
        %1832 = vmatprep.subr.mxu0 0.0
        %1833 = vmatpush1.msra.mxu0 0.0
        %1834 = vmatprep.subr.mxu0 0.0
        %1835 = vmatpush1.msra.mxu0 0.0
        %1836 = vmatprep.mubr.f32.mxu0 0.0
        %1837 = vmatmul.mubr.f32.gmra.mrb[0].mxu0 %v1767
        %v1838 = vpop.f32.mrb[0].mxu0
        %v1839 = vadd.f32 %v1749, %v1838
        %v1840 = vpop.f32.mrb[0].mxu0
        %1841 = vmatprep.mubr.f32.mxu0 0.0
        %1842 = vmatmul.mubr.f32.gmra.mrb[0].mxu0 %v1770
        %v1843 = vpop.f32.mrb[0].mxu0
        %v1844 = vadd.f32 %v1749, %v1843
        %v1845 = vpop.f32.mrb[0].mxu0
        %1846 = vdwg.mxu0
        %v1847 = vadd.f32 %v274, %v1839
        %v1848 = vadd.f32 %v275, %v1844
        %v1849 = vsel %vm297, %v1847, 0.0
        %1850 = vadd.xlane.f32.xlu0 %v1849
        %v1851 = vpop.xlane.xlu0 %1850
        %v1852 = vsel %vm297, %v1848, 0.0
        %1853 = vadd.xlane.f32.xlu0 %v1852
        %v1854 = vpop.xlane.xlu0 %1853
        %v1855 = vrcp.pop 32.0
        %v1856 = vmul.f32 %v1851, %v1855
        %v1857 = vmul.f32 %v1854, %v1855
        %v1858 = vsub.f32 %v1847, %v1856
        %v1859 = vsub.f32 %v1848, %v1857
        %v1860 = vmul.f32 %v1858, %v1858
        %v1861 = vmul.f32 %v1859, %v1859
        %v1862 = vsel %vm297, %v1860, 0.0
        %1863 = vadd.xlane.f32.xlu0 %v1862
        %v1864 = vpop.xlane.xlu0 %1863
        %v1865 = vsel %vm297, %v1861, 0.0
        %1866 = vadd.xlane.f32.xlu0 %v1865
        %v1867 = vpop.xlane.xlu0 %1866
        %v1868 = vmul.f32 %v1864, %v1855
        %v1869 = vmul.f32 %v1867, %v1855
        %v1870 = vadd.f32 %v1868, 1e-05
        %v1871 = vadd.f32 %v1869, 1e-05
        %v1872 = vrsqrt.pop %v1870
        %v1873 = vrsqrt.pop %v1871
        %v1874 = vmul.f32 %v1858, %v1872
        %v1875 = vmul.f32 %v1859, %v1873
        %v1876 = vlaneseq
        %v1877 = vshrl.u32 %v1876, 7
        %v1878 = vsub.s32 2, %v1877
        %v1879 = vrot.slane %v292, %v1878
        %v1880 = vmul.f32 %v1874, %v1879
        %v1881 = vmul.f32 %v1875, %v1879
        %v1882 = vlaneseq
        %v1883 = vshrl.u32 %v1882, 7
        %v1884 = vsub.s32 3, %v1883
        %v1885 = vrot.slane %v292, %v1884
        %v1886 = vadd.f32 %v1880, %v1885
        %v1887 = vadd.f32 %v1881, %v1885
        %v1888 = vlaneseq
        %v1889 = vshrl.u32 %v1888, 7
        %v1890 = vsub.s32 4, %v1889
        %v1891 = vrot.slane %v292, %v1890
        %v1893 = vsel %vm297, %v1886, 0
        %v1896 = vsel %vm297, %v1887, 0
        %1898 = vmatprep.subr.mxu0 0.0
        %1899 = vmatpush1.msra.mxu0 %v285
        %1900 = vmatprep.subr.mxu0 0.0
        %1901 = vmatpush1.msra.mxu0 %v287
        %1902 = vmatprep.subr.mxu0 0.0
        %1903 = vmatpush1.msra.mxu0 %v289
        %1904 = vmatprep.subr.mxu0 0.0
        %1905 = vmatpush1.msra.mxu0 %v291
        %1906 = vmatprep.subr.mxu0 0.0
        %1907 = vmatpush1.msra.mxu0 0.0
        %1908 = vmatprep.subr.mxu0 0.0
        %1909 = vmatpush1.msra.mxu0 0.0
        %1910 = vmatprep.subr.mxu0 0.0
        %1911 = vmatpush1.msra.mxu0 0.0
        %1912 = vmatprep.subr.mxu0 0.0
        %1913 = vmatpush1.msra.mxu0 0.0
        %1914 = vmatprep.subr.mxu0 0.0
        %1915 = vmatpush1.msra.mxu0 0.0
        %1916 = vmatprep.subr.mxu0 0.0
        %1917 = vmatpush1.msra.mxu0 0.0
        %1918 = vmatprep.subr.mxu0 0.0
        %1919 = vmatpush1.msra.mxu0 0.0
        %1920 = vmatprep.subr.mxu0 0.0
        %1921 = vmatpush1.msra.mxu0 0.0
        %1922 = vmatprep.subr.mxu0 0.0
        %1923 = vmatpush1.msra.mxu0 0.0
        %1924 = vmatprep.subr.mxu0 0.0
        %1925 = vmatpush1.msra.mxu0 0.0
        %1926 = vmatprep.subr.mxu0 0.0
        %1927 = vmatpush1.msra.mxu0 0.0
        %1928 = vmatprep.subr.mxu0 0.0
        %1929 = vmatpush1.msra.mxu0 0.0
        %1930 = vmatprep.subr.mxu0 0.0
        %1931 = vmatpush1.msra.mxu0 0.0
        %1932 = vmatprep.subr.mxu0 0.0
        %1933 = vmatpush1.msra.mxu0 0.0
        %1934 = vmatprep.subr.mxu0 0.0
        %1935 = vmatpush1.msra.mxu0 0.0
        %1936 = vmatprep.subr.mxu0 0.0
        %1937 = vmatpush1.msra.mxu0 0.0
        %1938 = vmatprep.subr.mxu0 0.0
        %1939 = vmatpush1.msra.mxu0 0.0
        %1940 = vmatprep.subr.mxu0 0.0
        %1941 = vmatpush1.msra.mxu0 0.0
        %1942 = vmatprep.subr.mxu0 0.0
        %1943 = vmatpush1.msra.mxu0 0.0
        %1944 = vmatprep.subr.mxu0 0.0
        %1945 = vmatpush1.msra.mxu0 0.0
        %1946 = vmatprep.subr.mxu0 0.0
        %1947 = vmatpush1.msra.mxu0 0.0
        %1948 = vmatprep.subr.mxu0 0.0
        %1949 = vmatpush1.msra.mxu0 0.0
        %1950 = vmatprep.subr.mxu0 0.0
        %1951 = vmatpush1.msra.mxu0 0.0
        %1952 = vmatprep.subr.mxu0 0.0
        %1953 = vmatpush1.msra.mxu0 0.0
        %1954 = vmatprep.subr.mxu0 0.0
        %1955 = vmatpush1.msra.mxu0 0.0
        %1956 = vmatprep.subr.mxu0 0.0
        %1957 = vmatpush1.msra.mxu0 0.0
        %1958 = vmatprep.subr.mxu0 0.0
        %1959 = vmatpush1.msra.mxu0 0.0
        %1960 = vmatprep.subr.mxu0 0.0
        %1961 = vmatpush1.msra.mxu0 0.0
        %1962 = vmatprep.mubr.f32.mxu0 0.0
        %1963 = vmatmul.mubr.f32.gmra.mrb[0].mxu0 %v1893
        %v1964 = vpop.f32.mrb[0].mxu0
        %v1965 = vadd.f32 %v1891, %v1964
        %v1966 = vpop.f32.mrb[0].mxu0
        %1967 = vmatprep.mubr.f32.mxu0 0.0
        %1968 = vmatmul.mubr.f32.gmra.mrb[0].mxu0 %v1896
        %v1969 = vpop.f32.mrb[0].mxu0
        %v1970 = vadd.f32 %v1891, %v1969
        %v1971 = vpop.f32.mrb[0].mxu0
        %1972 = vdwg.mxu0
        %v1973 = vmul.f32 %v1965, 0.5
        %v1974 = vmul.f32 %v1970, 0.5
        %v1975 = vmul.f32 %v1965, 0.70710677
        %v1976 = vmul.f32 %v1970, 0.70710677
        %v1977 = verf.f32.pop %v1975
        %v1978 = verf.f32.pop %v1976
        %v1979 = vadd.f32 %v1977, 1.0
        %v1980 = vadd.f32 %v1978, 1.0
        %v1981 = vmul.f32 %v1973, %v1979
        %v1982 = vmul.f32 %v1974, %v1980
        %v1983 = vlaneseq
        %v1984 = vshrl.u32 %v1983, 7
        %v1985 = vsub.s32 5, %v1984
        %v1986 = vrot.slane %v292, %v1985
        %1991 = vrot.lane.b32.xlu0 %v285, 64
        %v1992 = vpop.permute.xlu0 %1991
        %1993 = vrot.lane.b32.xlu0 %v287, 64
        %v1994 = vpop.permute.xlu0 %1993
        %1995 = vrot.lane.b32.xlu0 %v289, 64
        %v1996 = vpop.permute.xlu0 %1995
        %1997 = vrot.lane.b32.xlu0 %v291, 64
        %v1998 = vpop.permute.xlu0 %1997
        %vm1999 = vcmask 523264
        %v2001 = vsel %vm1999, %v1981, 0
        %v2004 = vsel %vm1999, %v1982, 0
        %v2006 = vsel %vm1999, %v1992, 0
        %v2008 = vsel %vm1999, %v1994, 0
        %v2010 = vsel %vm1999, %v1996, 0
        %v2012 = vsel %vm1999, %v1998, 0
        %2014 = vmatprep.subr.mxu0 0.0
        %2015 = vmatpush1.xpose.msra.mxu0 %v2006
        %2016 = vmatprep.subr.mxu0 0.0
        %2017 = vmatpush1.xpose.msra.mxu0 %v2008
        %2018 = vmatprep.subr.mxu0 0.0
        %2019 = vmatpush1.xpose.msra.mxu0 %v2010
        %2020 = vmatprep.subr.mxu0 0.0
        %2021 = vmatpush1.xpose.msra.mxu0 %v2012
        %2022 = vmatprep.subr.mxu0 0.0
        %2023 = vmatpush1.xpose.msra.mxu0 0.0
        %2024 = vmatprep.subr.mxu0 0.0
        %2025 = vmatpush1.xpose.msra.mxu0 0.0
        %2026 = vmatprep.subr.mxu0 0.0
        %2027 = vmatpush1.xpose.msra.mxu0 0.0
        %2028 = vmatprep.subr.mxu0 0.0
        %2029 = vmatpush1.xpose.msra.mxu0 0.0
        %2030 = vmatprep.subr.mxu0 0.0
        %2031 = vmatpush1.xpose.msra.mxu0 0.0
        %2032 = vmatprep.subr.mxu0 0.0
        %2033 = vmatpush1.xpose.msra.mxu0 0.0
        %2034 = vmatprep.subr.mxu0 0.0
        %2035 = vmatpush1.xpose.msra.mxu0 0.0
        %2036 = vmatprep.subr.mxu0 0.0
        %2037 = vmatpush1.xpose.msra.mxu0 0.0
        %2038 = vmatprep.subr.mxu0 0.0
        %2039 = vmatpush1.xpose.msra.mxu0 0.0
        %2040 = vmatprep.subr.mxu0 0.0
        %2041 = vmatpush1.xpose.msra.mxu0 0.0
        %2042 = vmatprep.subr.mxu0 0.0
        %2043 = vmatpush1.xpose.msra.mxu0 0.0
        %2044 = vmatprep.subr.mxu0 0.0
        %2045 = vmatpush1.xpose.msra.mxu0 0.0
        %2046 = vmatprep.subr.mxu0 0.0
        %2047 = vmatpush1.xpose.msra.mxu0 0.0
        %2048 = vmatprep.subr.mxu0 0.0
        %2049 = vmatpush1.xpose.msra.mxu0 0.0
        %2050 = vmatprep.subr.mxu0 0.0
        %2051 = vmatpush1.xpose.msra.mxu0 0.0
        %2052 = vmatprep.subr.mxu0 0.0
        %2053 = vmatpush1.xpose.msra.mxu0 0.0
        %2054 = vmatprep.subr.mxu0 0.0
        %2055 = vmatpush1.xpose.msra.mxu0 0.0
        %2056 = vmatprep.subr.mxu0 0.0
        %2057 = vmatpush1.xpose.msra.mxu0 0.0
        %2058 = vmatprep.subr.mxu0 0.0
        %2059 = vmatpush1.xpose.msra.mxu0 0.0
        %2060 = vmatprep.subr.mxu0 0.0
        %2061 = vmatpush1.xpose.msra.mxu0 0.0
        %2062 = vmatprep.subr.mxu0 0.0
        %2063 = vmatpush1.xpose.msra.mxu0 0.0
        %2064 = vmatprep.subr.mxu0 0.0
        %2065 = vmatpush1.xpose.msra.mxu0 0.0
        %2066 = vmatprep.subr.mxu0 0.0
        %2067 = vmatpush1.xpose.msra.mxu0 0.0
        %2068 = vmatprep.subr.mxu0 0.0
        %2069 = vmatpush1.xpose.msra.mxu0 0.0
        %2070 = vmatprep.subr.mxu0 0.0
        %2071 = vmatpush1.xpose.msra.mxu0 0.0
        %2072 = vmatprep.subr.mxu0 0.0
        %2073 = vmatpush1.xpose.msra.mxu0 0.0
        %2074 = vmatprep.subr.mxu0 0.0
        %2075 = vmatpush1.xpose.msra.mxu0 0.0
        %2076 = vmatprep.subr.mxu0 0.0
        %2077 = vmatpush1.xpose.msra.mxu0 0.0
        %2078 = vmatprep.mubr.f32.mxu0 0.0
        %2079 = vmatmul.mubr.f32.gmra.mrb[0].mxu0 %v2001
        %v2080 = vpop.f32.mrb[0].mxu0
        %v2081 = vadd.f32 %v1986, %v2080
        %v2082 = vpop.f32.mrb[0].mxu0
        %2083 = vmatprep.mubr.f32.mxu0 0.0
        %2084 = vmatmul.mubr.f32.gmra.mrb[0].mxu0 %v2004
        %v2085 = vpop.f32.mrb[0].mxu0
        %v2086 = vadd.f32 %v1986, %v2085
        %v2087 = vpop.f32.mrb[0].mxu0
        %2088 = vdwg.mxu0
        %v2089 = vadd.f32 %v1886, %v2081
        %v2090 = vadd.f32 %v1887, %v2086
        %v2091 = vsel %vm297, %v2089, 0.0
        %2092 = vadd.xlane.f32.xlu0 %v2091
        %v2093 = vpop.xlane.xlu0 %2092
        %v2094 = vsel %vm297, %v2090, 0.0
        %2095 = vadd.xlane.f32.xlu0 %v2094
        %v2096 = vpop.xlane.xlu0 %2095
        %v2097 = vmul.f32 %v2093, %v1855
        %v2098 = vmul.f32 %v2096, %v1855
        %v2099 = vsub.f32 %v2089, %v2097
        %v2100 = vsub.f32 %v2090, %v2098
        %v2101 = vmul.f32 %v2099, %v2099
        %v2102 = vmul.f32 %v2100, %v2100
        %v2103 = vsel %vm297, %v2101, 0.0
        %2104 = vadd.xlane.f32.xlu0 %v2103
        %v2105 = vpop.xlane.xlu0 %2104
        %v2106 = vsel %vm297, %v2102, 0.0
        %2107 = vadd.xlane.f32.xlu0 %v2106
        %v2108 = vpop.xlane.xlu0 %2107
        %v2109 = vmul.f32 %v2105, %v1855
        %v2110 = vmul.f32 %v2108, %v1855
        %v2111 = vadd.f32 %v2109, 1e-05
        %v2112 = vadd.f32 %v2110, 1e-05
        %v2113 = vrsqrt.pop %v2111
        %v2114 = vrsqrt.pop %v2112
        %v2115 = vmul.f32 %v2099, %v2113
        %v2116 = vmul.f32 %v2100, %v2114
        %v2117 = vlaneseq
        %v2118 = vshrl.u32 %v2117, 7
        %v2119 = vsub.s32 6, %v2118
        %v2120 = vrot.slane %v292, %v2119
        %v2121 = vmul.f32 %v2115, %v2120
        %v2122 = vmul.f32 %v2116, %v2120
        %v2123 = vlaneseq
        %v2124 = vshrl.u32 %v2123, 7
        %v2125 = vsub.s32 7, %v2124
        %v2126 = vrot.slane %v292, %v2125
        %v2127 = vadd.f32 %v2121, %v2126
        %v2128 = vadd.f32 %v2122, %v2126
        %2129 = vst.msk [vmem:[#allocation9] sm:$0xff] %vm297, %v2127
        %2130 = vst.msk [vmem:[#allocation9 + $0x8] sm:$0xff] %vm297, %v2128
        // Predicated region
        $region57: #{tpu_custom_call.1} parent=35 // pred_check
          %p2131 = pneg %p125
        $region58: #{tpu_custom_call.1} parent=35 // pred_check_branch
          %2133 = sbr.rel (%p2131) target = $region60
        $region59: #{tpu_custom_call.1} parent=35 // pred_region
          %s2135 = ssub.s32 256, 256
          %2136 = vsyncadd [#allocation4], %s2135
          %s2137 = sshll.u32 [#allocation9], 4
          %s2138 = int_to_ptr.vmem [resolvable:$true] %s2137
          %2143 = dma.vmem_to_hbm [thread:$0]  %s2138, 256, %s4, [#allocation4], 128, 128, 8
        $region60: #{tpu_custom_call.1} parent=35 // pred_fallthru
          _
        // Predicated region
        $region61: #{tpu_custom_call.1} parent=35 // pred_check
          %p2144 = pneg %p125
        $region62: #{tpu_custom_call.1} parent=35 // pred_check_branch
          %2146 = sbr.rel (%p2144) target = $region64
        $region63: #{tpu_custom_call.1} parent=35 // pred_region
          %2147 = dma.done [#allocation4], 256
        $region64: #{tpu_custom_call.1} parent=35 // pred_fallthru
          _
      $region36: #{tpu_custom_call.1} parent=5 // pred_fallthru
        _
      %p2148 = scmp.le.s32.totalorder 2, %s13
      // Predicated region
      $region65: #{tpu_custom_call.1} parent=5 // pred_check
        %p2149 = pneg %p2148
      $region66: #{tpu_custom_call.1} parent=5 // pred_check_branch
        %2151 = sbr.rel (%p2149) target = $region68
      $region67: #{tpu_custom_call.1} parent=5 // pred_region
        %s2152 = ssub.s32 %s13, 2
      $region68: #{tpu_custom_call.1} parent=5 // pred_fallthru
        _
    $region6: #{tpu_custom_call.1} parent=1 // loop_footer
      %s17 = sadd.s32 1, %s13
    $region7: #{tpu_custom_call.1} parent=1 // loop_footer_branch
      %12 = sbr.rel target = $region3
    $region8: #{tpu_custom_call.1} parent=1 // loop_exit
      _
    %2153 = vsyncpa [#allocation3], 1
    %s2154 = scalar_lea.sflag [#allocation3], 1
    %2155 = vsyncpa %s2154, 1
    %2156 = vsyncpa [#allocation6], 1
    %2157 = vsyncpa [#allocation4], 1
    %s2158 = scalar_lea.sflag [#allocation4], 1
    %2159 = vsyncpa %s2158, 1

</llo_original>
